<compile_context>
chip_gen: v5e
topology: v5e:2x2
jax: 0.10.0
libtpu: 0.0.40
codegen_flags: <defaults>
</compile_context>

<pallas_src>
import functools

import jax
import jax.numpy as jnp
from jax.experimental import pallas as pl
from jax.experimental.pallas import tpu as pltpu

IN_DIM = 4
HIDDEN = 128
N_ACTIONS = 2


def policy_kernel(x_ref, w1_ref, b1_ref, w2d_ref, b2d_ref, out_ref):
    # x_ref:  (tb, 4)      w1_ref: (4, 128)     b1_ref: (1, 128)
    # w2d_ref:(128, 1)     b2d_ref:(1, 1) scalar in SMEM
    # out_ref:(tb, 2)   -> col 0 = P(action 0), col 1 = P(action 1)

    # Layer 1 + ReLU (hidden dim on the lane axis -> lane-dense VPU work).
    h = jnp.dot(x_ref[...], w1_ref[...], preferred_element_type=jnp.float32)
    h = jnp.maximum(h + b1_ref[...], 0.0)                          # (tb, 128)

    # 2-class softmax == sigmoid of the logit difference (diff folded in wrapper).
    logit = jnp.dot(h, w2d_ref[...], preferred_element_type=jnp.float32)
    logit = logit + b2d_ref[0, 0]                                  # (tb, 1)

    # Numerically-stable sigmoid: EUP exp + VPU select, no cross-lane reductions.
    # NOTE: exact divide on purpose; pl.reciprocal(approx=True) (~2^-12 rel err)
    # would break the 1e-5 tolerance.
    z = jnp.exp(-jnp.abs(logit))
    inv = 1.0 / (1.0 + z)
    p0 = jnp.where(logit >= 0.0, inv, z * inv)                     # softmax[..., 0]
    p1 = 1.0 - p0                                                  # softmax[..., 1]

    # Direct column stores (tiny masked vst; avoids a concat/relayout).
    out_ref[:, 0:1] = p0.astype(out_ref.dtype)
    out_ref[:, 1:2] = p1.astype(out_ref.dtype)


@functools.partial(jax.jit, static_argnames=("block_b",))
def policy_forward(x, w1, b1, w2, b2, *, block_b=8192):
    """x: (B, 4); weights stored (in_features, out_features). Returns (B, 2)."""
    B = x.shape[0]
    x = x.astype(jnp.float32)

    # Tile width: multiple of 128, aim for >=2 grid steps (v7x megacore), cap
    # at block_b so the (tb, 128) hidden temporary stays a few MiB of VMEM.
    tb = max(128, min(block_b, pl.cdiv(pl.cdiv(B, 2), 128) * 128))
    B_pad = pl.cdiv(B, tb) * tb
    if B_pad != B:
        # Only ragged batches pay for a pad; padded rows see zero inputs (no
        # OOB VMEM reads) and are sliced off below.
        x = jnp.pad(x, ((0, B_pad - B), (0, 0)))
    grid = (B_pad // tb,)

    # Tiny one-off weight transforms (exact softmax -> sigmoid fold).
    b1r = b1.reshape(1, HIDDEN)
    w2d = (w2[:, 0] - w2[:, 1]).reshape(HIDDEN, 1)
    b2d = (b2.reshape(-1)[0] - b2.reshape(-1)[1]).reshape(1, 1)

    flops = 2 * B_pad * (IN_DIM * HIDDEN + HIDDEN)
    bytes_accessed = 4 * (B_pad * (IN_DIM + N_ACTIONS)
                          + IN_DIM * HIDDEN + 2 * HIDDEN + 1)

    out = pl.pallas_call(
        policy_kernel,
        out_shape=jax.ShapeDtypeStruct((B_pad, N_ACTIONS), jnp.float32),
        grid=grid,
        in_specs=[
            pl.BlockSpec((tb, IN_DIM), lambda i: (i, 0)),         # x streamed
            pl.BlockSpec((IN_DIM, HIDDEN), lambda i: (0, 0)),     # weights resident
            pl.BlockSpec((1, HIDDEN), lambda i: (0, 0)),
            pl.BlockSpec((HIDDEN, 1), lambda i: (0, 0)),
            pl.BlockSpec(memory_space=pltpu.MemorySpace.SMEM),    # scalar bias diff
        ],
        out_specs=pl.BlockSpec((tb, N_ACTIONS), lambda i: (i, 0)),
        compiler_params=pltpu.CompilerParams(
            dimension_semantics=("parallel",),   # shard batch across TCs on v7x
        ),
        cost_estimate=pl.CostEstimate(
            flops=flops, transcendentals=B_pad, bytes_accessed=bytes_accessed),
    )(x, w1, b1r, w2d, b2d)

    return out if B_pad == B else out[:B]


def init_params(key):
    # Deterministic init mimicking nn.Linear defaults (uniform in +-1/sqrt(fan_in)).
    k1, k2, k3, k4 = jax.random.split(key, 4)
    bound1 = 1.0 / jnp.sqrt(4.0)
    bound2 = 1.0 / jnp.sqrt(128.0)
    w1 = jax.random.uniform(k1, (IN_DIM, HIDDEN), jnp.float32, -bound1, bound1)
    b1 = jax.random.uniform(k2, (1, HIDDEN), jnp.float32, -bound1, bound1)
    w2 = jax.random.uniform(k3, (HIDDEN, N_ACTIONS), jnp.float32, -bound2, bound2)
    b2 = jax.random.uniform(k4, (1, N_ACTIONS), jnp.float32, -bound2, bound2)
    return w1, b1, w2, b2


if __name__ == "__main__":
    key = jax.random.PRNGKey(0)
    k_params, k_x = jax.random.split(key)
    w1, b1, w2, b2 = init_params(k_params)

    # Batch of CartPole-style 4-dim observations. B=1024 splits into two
    # 512-row tiles, exercising the pipelined grid (and megacore on v7x).
    B = 1024
    x = jax.random.normal(k_x, (B, IN_DIM), jnp.float32)

    probs = policy_forward(x, w1, b1, w2, b2)
    probs = jax.block_until_ready(probs)

    # Reference check against plain JAX (same math as the PyTorch module).
    h_ref = jnp.maximum(x @ w1 + b1, 0.0)
    ref = jax.nn.softmax(h_ref @ w2 + b2, axis=1)
    assert probs.shape == (B, N_ACTIONS)
    assert jnp.allclose(probs, ref, atol=1e-5), "mismatch vs reference"
    assert jnp.allclose(jnp.sum(probs, axis=1), 1.0, atol=1e-5)

    print("KERNEL_OK")
</pallas_src>

<mosaic_0001>
module attributes {stable_mosaic.version = 11 : i64} {
  func.func @policy_kernel(%arg0: i32, %arg1: memref<512x4xf32, #tpu.memory_space<vmem>>, %arg2: memref<4x128xf32, #tpu.memory_space<vmem>>, %arg3: memref<1x128xf32, #tpu.memory_space<vmem>>, %arg4: memref<128x1xf32, #tpu.memory_space<vmem>>, %arg5: memref<1x1xf32, #tpu.memory_space<smem>>, %arg6: memref<512x2xf32, #tpu.memory_space<vmem>>) attributes {dimension_semantics = [#tpu.dimension_semantics<parallel>], iteration_bounds = array<i64: 2>, scalar_prefetch = 0 : i64, scratch_operands = 0 : i64, tpu.core_type = #tpu.core_type<tc>, window_params = [{transform_indices = @transform_0, window_bounds = array<i64: 512, 4>}, {pipeline_mode = #tpu.pipeline_mode<synchronous>, transform_indices = @transform_1, window_bounds = array<i64: 4, 128>}, {pipeline_mode = #tpu.pipeline_mode<synchronous>, transform_indices = @transform_2, window_bounds = array<i64: 1, 128>}, {pipeline_mode = #tpu.pipeline_mode<synchronous>, transform_indices = @transform_3, window_bounds = array<i64: 128, 1>}, {transform_indices = @transform_4, window_bounds = array<i64: 1, 1>}, {transform_indices = @transform_5, window_bounds = array<i64: 512, 2>}]} {
    %c0 = arith.constant 0 : index
    %c0_0 = arith.constant 0 : index
    %0 = vector.load %arg1[%c0, %c0_0] : memref<512x4xf32, #tpu.memory_space<vmem>>, vector<512x4xf32>
    %c0_1 = arith.constant 0 : index
    %c0_2 = arith.constant 0 : index
    %1 = vector.load %arg2[%c0_1, %c0_2] : memref<4x128xf32, #tpu.memory_space<vmem>>, vector<4x128xf32>
    %cst = arith.constant dense<0.000000e+00> : vector<512x128xf32>
    %2 = tpu.matmul %0, %1, %cst {dimension_numbers = #tpu.dot_dimension_numbers<[1], [0], [0], [1], [0, 0, 1, 1], [], []>} : vector<512x4xf32>, vector<4x128xf32>, vector<512x128xf32> -> vector<512x128xf32>
    %c0_3 = arith.constant 0 : index
    %c0_4 = arith.constant 0 : index
    %3 = vector.load %arg3[%c0_3, %c0_4] : memref<1x128xf32, #tpu.memory_space<vmem>>, vector<1x128xf32>
    %4 = vector.broadcast %3 : vector<1x128xf32> to vector<512x128xf32>
    %5 = arith.addf %2, %4 : vector<512x128xf32>
    %cst_5 = arith.constant 0.000000e+00 : f32
    %6 = vector.broadcast %cst_5 : f32 to vector<512x128xf32>
    %7 = arith.maximumf %5, %6 : vector<512x128xf32>
    %c0_6 = arith.constant 0 : index
    %c0_7 = arith.constant 0 : index
    %8 = vector.load %arg4[%c0_6, %c0_7] : memref<128x1xf32, #tpu.memory_space<vmem>>, vector<128x1xf32>
    %cst_8 = arith.constant dense<0.000000e+00> : vector<512x1xf32>
    %9 = tpu.matmul %7, %8, %cst_8 {dimension_numbers = #tpu.dot_dimension_numbers<[1], [0], [0], [1], [0, 0, 1, 1], [], []>} : vector<512x128xf32>, vector<128x1xf32>, vector<512x1xf32> -> vector<512x1xf32>
    %c0_9 = arith.constant 0 : index
    %c0_10 = arith.constant 0 : index
    %10 = memref.load %arg5[%c0_9, %c0_10] : memref<1x1xf32, #tpu.memory_space<smem>>
    %11 = vector.broadcast %10 : f32 to vector<512x1xf32>
    %12 = arith.addf %9, %11 : vector<512x1xf32>
    %13 = math.absf %12 : vector<512x1xf32>
    %cst_11 = arith.constant 0.000000e+00 : f32
    %14 = vector.broadcast %cst_11 : f32 to vector<512x1xf32>
    %15 = arith.subf %14, %13 : vector<512x1xf32>
    %16 = math.exp %15 : vector<512x1xf32>
    %cst_12 = arith.constant 1.000000e+00 : f32
    %17 = vector.broadcast %cst_12 : f32 to vector<512x1xf32>
    %18 = arith.addf %17, %16 : vector<512x1xf32>
    %cst_13 = arith.constant 1.000000e+00 : f32
    %19 = vector.broadcast %cst_13 : f32 to vector<512x1xf32>
    %20 = arith.divf %19, %18 : vector<512x1xf32>
    %cst_14 = arith.constant 0.000000e+00 : f32
    %21 = vector.broadcast %cst_14 : f32 to vector<512x1xf32>
    %22 = arith.cmpf oge, %12, %21 : vector<512x1xf32>
    %23 = arith.mulf %16, %20 : vector<512x1xf32>
    %24 = arith.select %22, %20, %23 : vector<512x1xi1>, vector<512x1xf32>
    %cst_15 = arith.constant 1.000000e+00 : f32
    %25 = vector.broadcast %cst_15 : f32 to vector<512x1xf32>
    %26 = arith.subf %25, %24 : vector<512x1xf32>
    %c0_16 = arith.constant 0 : index
    %c0_17 = arith.constant 0 : index
    %27 = vector.load %arg6[%c0_16, %c0_17] : memref<512x2xf32, #tpu.memory_space<vmem>>, vector<512x1xf32>
    tpu.vector_store %arg6[%c0_16, %c0_17], %24 {strides = array<i32>} : memref<512x2xf32, #tpu.memory_space<vmem>>, vector<512x1xf32>,
    %c0_18 = arith.constant 0 : index
    %c1 = arith.constant 1 : index
    %28 = vector.load %arg6[%c0_18, %c1] : memref<512x2xf32, #tpu.memory_space<vmem>>, vector<512x1xf32>
    tpu.vector_store %arg6[%c0_18, %c1], %26 {strides = array<i32>} : memref<512x2xf32, #tpu.memory_space<vmem>>, vector<512x1xf32>,
    return
  }
  func.func @transform_0(%arg0: i32) -> (i32, i32) {
    %c0_i32 = arith.constant 0 : i32
    %c0_i32_0 = arith.constant 0 : i32
    return %arg0, %c0_i32 : i32, i32
  }
  func.func @transform_1(%arg0: i32) -> (i32, i32) {
    %c0_i32 = arith.constant 0 : i32
    %c0_i32_0 = arith.constant 0 : i32
    %c0_i32_1 = arith.constant 0 : i32
    return %c0_i32, %c0_i32_0 : i32, i32
  }
  func.func @transform_2(%arg0: i32) -> (i32, i32) {
    %c0_i32 = arith.constant 0 : i32
    %c0_i32_0 = arith.constant 0 : i32
    %c0_i32_1 = arith.constant 0 : i32
    return %c0_i32, %c0_i32_0 : i32, i32
  }
  func.func @transform_3(%arg0: i32) -> (i32, i32) {
    %c0_i32 = arith.constant 0 : i32
    %c0_i32_0 = arith.constant 0 : i32
    %c0_i32_1 = arith.constant 0 : i32
    return %c0_i32, %c0_i32_0 : i32, i32
  }
  func.func @transform_4(%arg0: i32) -> (i32, i32) {
    %c0_i32 = arith.constant 0 : i32
    %c0_i32_0 = arith.constant 0 : i32
    %c0_i32_1 = arith.constant 0 : i32
    return %c0_i32, %c0_i32_0 : i32, i32
  }
  func.func @transform_5(%arg0: i32) -> (i32, i32) {
    %c0_i32 = arith.constant 0 : i32
    %c0_i32_0 = arith.constant 0 : i32
    return %arg0, %c0_i32 : i32, i32
  }
}

</mosaic_0001>

<llo_original>
// kernel: policy_forward.1
$region0: #{policy_forward.1}
  #allocation0 [shape = 'u32[]', space=smem, size = 0x4, offset = 0x4, fixed_abs, tag = 'smem constant byte address 0x4 - core index']
  #allocation1 [shape = 'u32[72,128]{1,0:T(1,128)}', space=vmem, size = 0x9000, scoped, tag = 'internal scratch']
  #allocation2 [shape = 'f32[1,1]{1,0:T(1,128)S(6)}', space=smem, size = 0x200, scoped, tag = 'scoped memory for policy_forward.1']
  %s0 = inlined_call_operand.vmem [shape: f32[1024,4], index: 0, kind: input, shape index: {}]
  %s1 = inlined_call_operand.vmem [shape: f32[4,128], index: 1, kind: input, shape index: {}]
  %s2 = inlined_call_operand.vmem [shape: f32[1,128], index: 2, kind: input, shape index: {}]
  %s3 = inlined_call_operand.vmem [shape: f32[128,1], index: 3, kind: input, shape index: {}]
  %s4 = inlined_call_operand.<no memory space> [shape: f32[1,1], index: 4, kind: input, shape index: {}]
  %s5 = inlined_call_operand.vmem [shape: f32[1024,2], index: 5, kind: output, shape index: {}]
  %s6 = sld [smem:[#allocation0]]
  $region53: #{policy_forward.1} parent=0
    _
  %s8 = ssub.s32 1, %s6
  %s9 = scalar_select 0, %s8, %s6
  %10 = sst [smem:[#allocation2]] %s4
  loop: start=0, step=1, limit=4
  $region2: #{policy_forward.1} parent=0 // loop_pre_header
    _
  $region3: #{policy_forward.1} parent=0 // loop_header
    %s12 = sphi 0, %s16
    %p13 = scmp.ge.s32.totalorder %s12, 4
    %s22 = sphi 0, %s24
    %s25 = sphi 0, %s22
    %s26 = sphi 0, %s25
    %s42 = sphi 0, %s26
    %s46 = sphi 0, %s46
    %s48 = sphi 0, %s46
    %s49 = sphi 0, %s48
    %s63 = sphi 0, %s49
    %s67 = sphi 0, %s67
    %s69 = sphi 0, %s67
    %s70 = sphi 0, %s69
    %s84 = sphi 0, %s70
    %s88 = sphi 0, %s88
    %s90 = sphi 0, %s88
    %s91 = sphi 0, %s90
    %s105 = sphi 0, %s91
    %s109 = sphi 0, %s109
    %s111 = sphi 0, %s109
    %s112 = sphi 0, %s111
    %s126 = sphi 0, %s112
    %s132 = sphi 0, %s134
    %s135 = sphi 0, %s132
    %s136 = sphi 0, %s135
    %s152 = sphi 0, %s136
  $region4: #{policy_forward.1} parent=0 // loop_header_branch
    %15 = sbr.rel (%p13) target = $region8
  $region5: #{policy_forward.1} parent=0 // loop_body
    %s17 = ssub.s32 %s12, 1
    %s18 = ssub.s32 %s12, 2
    %s19 = sadd.s32 %s12, 1
    %s20 = ssub.s32 %s12, %s19
    %p21 = scmp.eq.s32.totalorder %s20, 0
    %s23 = sadd.s32 %s22, 1
    %s24 = scalar_select %p21, %s22, %s23
    %p27 = pneg %p21
    %p28 = scmp.eq.s32.totalorder %s12, 1
    %p29 = por %p27, %p28
    %p30 = scmp.ne.s32.totalorder %s22, %s25
    %p31 = scmp.eq.s32.totalorder %s12, 0
    %p32 = por %p30, %p31
    %p33 = scmp.ne.s32.totalorder %s22, %s25
    %p34 = scmp.eq.s32.totalorder %s17, 1
    %p35 = por %p33, %p34
    %p36 = scmp.ne.s32.totalorder %s25, %s26
    %p37 = scmp.eq.s32.totalorder %s17, 0
    %p38 = por %p36, %p37
    %p39 = scmp.ne.s32.totalorder %s25, %s26
    %p40 = scmp.eq.s32.totalorder %s18, 1
    %p41 = por %p39, %p40
    %p43 = scmp.ne.s32.totalorder %s26, %s42
    %p44 = scmp.eq.s32.totalorder %s18, 0
    %p45 = por %p43, %p44
    %s47 = sadd.s32 %s46, 1
    %p50 = scmp.eq.s32.totalorder %s12, 1
    %p51 = scmp.ne.s32.totalorder %s46, %s48
    %p52 = scmp.eq.s32.totalorder %s12, 0
    %p53 = por %p51, %p52
    %p54 = scmp.ne.s32.totalorder %s46, %s48
    %p55 = scmp.eq.s32.totalorder %s17, 1
    %p56 = por %p54, %p55
    %p57 = scmp.ne.s32.totalorder %s48, %s49
    %p58 = scmp.eq.s32.totalorder %s17, 0
    %p59 = por %p57, %p58
    %p60 = scmp.ne.s32.totalorder %s48, %s49
    %p61 = scmp.eq.s32.totalorder %s18, 1
    %p62 = por %p60, %p61
    %p64 = scmp.ne.s32.totalorder %s49, %s63
    %p65 = scmp.eq.s32.totalorder %s18, 0
    %p66 = por %p64, %p65
    %s68 = sadd.s32 %s67, 1
    %p71 = scmp.eq.s32.totalorder %s12, 1
    %p72 = scmp.ne.s32.totalorder %s67, %s69
    %p73 = scmp.eq.s32.totalorder %s12, 0
    %p74 = por %p72, %p73
    %p75 = scmp.ne.s32.totalorder %s67, %s69
    %p76 = scmp.eq.s32.totalorder %s17, 1
    %p77 = por %p75, %p76
    %p78 = scmp.ne.s32.totalorder %s69, %s70
    %p79 = scmp.eq.s32.totalorder %s17, 0
    %p80 = por %p78, %p79
    %p81 = scmp.ne.s32.totalorder %s69, %s70
    %p82 = scmp.eq.s32.totalorder %s18, 1
    %p83 = por %p81, %p82
    %p85 = scmp.ne.s32.totalorder %s70, %s84
    %p86 = scmp.eq.s32.totalorder %s18, 0
    %p87 = por %p85, %p86
    %s89 = sadd.s32 %s88, 1
    %p92 = scmp.eq.s32.totalorder %s12, 1
    %p93 = scmp.ne.s32.totalorder %s88, %s90
    %p94 = scmp.eq.s32.totalorder %s12, 0
    %p95 = por %p93, %p94
    %p96 = scmp.ne.s32.totalorder %s88, %s90
    %p97 = scmp.eq.s32.totalorder %s17, 1
    %p98 = por %p96, %p97
    %p99 = scmp.ne.s32.totalorder %s90, %s91
    %p100 = scmp.eq.s32.totalorder %s17, 0
    %p101 = por %p99, %p100
    %p102 = scmp.ne.s32.totalorder %s90, %s91
    %p103 = scmp.eq.s32.totalorder %s18, 1
    %p104 = por %p102, %p103
    %p106 = scmp.ne.s32.totalorder %s91, %s105
    %p107 = scmp.eq.s32.totalorder %s18, 0
    %p108 = por %p106, %p107
    %s110 = sadd.s32 %s109, 1
    %p113 = scmp.eq.s32.totalorder %s12, 1
    %p114 = scmp.ne.s32.totalorder %s109, %s111
    %p115 = scmp.eq.s32.totalorder %s12, 0
    %p116 = por %p114, %p115
    %p117 = scmp.ne.s32.totalorder %s109, %s111
    %p118 = scmp.eq.s32.totalorder %s17, 1
    %p119 = por %p117, %p118
    %p120 = scmp.ne.s32.totalorder %s111, %s112
    %p121 = scmp.eq.s32.totalorder %s17, 0
    %p122 = por %p120, %p121
    %p123 = scmp.ne.s32.totalorder %s111, %s112
    %p124 = scmp.eq.s32.totalorder %s18, 1
    %p125 = por %p123, %p124
    %p127 = scmp.ne.s32.totalorder %s112, %s126
    %p128 = scmp.eq.s32.totalorder %s18, 0
    %p129 = por %p127, %p128
    %s130 = ssub.s32 %s12, %s19
    %p131 = scmp.eq.s32.totalorder %s130, 0
    %s133 = sadd.s32 %s132, 1
    %s134 = scalar_select %p131, %s132, %s133
    %p137 = pneg %p131
    %p138 = scmp.eq.s32.totalorder %s12, 1
    %p139 = por %p137, %p138
    %p140 = scmp.ne.s32.totalorder %s132, %s135
    %p141 = scmp.eq.s32.totalorder %s12, 0
    %p142 = por %p140, %p141
    %p143 = scmp.ne.s32.totalorder %s132, %s135
    %p144 = scmp.eq.s32.totalorder %s17, 1
    %p145 = por %p143, %p144
    %p146 = scmp.ne.s32.totalorder %s135, %s136
    %p147 = scmp.eq.s32.totalorder %s17, 0
    %p148 = por %p146, %p147
    %p149 = scmp.ne.s32.totalorder %s135, %s136
    %p150 = scmp.eq.s32.totalorder %s18, 1
    %p151 = por %p149, %p150
    %p153 = scmp.ne.s32.totalorder %s136, %s152
    %p154 = scmp.eq.s32.totalorder %s18, 0
    %p155 = por %p153, %p154
    %p156 = scmp.le.s32.totalorder 1, %s12
    %p157 = scmp.lt.s32.totalorder %s12, 3
    %p158 = pnand %p156, %p157
    %p159 = pneg %p158
    // Predicated region
    $region9: #{policy_forward.1} parent=5 // pred_check
      _
    $region10: #{policy_forward.1} parent=5 // pred_check_branch
      %161 = sbr.rel (%p158) target = $region12
    $region11: #{policy_forward.1} parent=5 // pred_region
      %s162 = ssub.s32 %s12, 1
      // Predicated region
      $region13: #{policy_forward.1} parent=11 // pred_check
        %p163 = pneg %p59
      $region14: #{policy_forward.1} parent=11 // pred_check_branch
        %165 = sbr.rel (%p163) target = $region16
      $region15: #{policy_forward.1} parent=11 // pred_region
        _
      $region16: #{policy_forward.1} parent=11 // pred_fallthru
        _
      // Predicated region
      $region17: #{policy_forward.1} parent=11 // pred_check
        %p166 = pneg %p80
      $region18: #{policy_forward.1} parent=11 // pred_check_branch
        %168 = sbr.rel (%p166) target = $region20
      $region19: #{policy_forward.1} parent=11 // pred_region
        _
      $region20: #{policy_forward.1} parent=11 // pred_fallthru
        _
      // Predicated region
      $region21: #{policy_forward.1} parent=11 // pred_check
        %p169 = pneg %p101
      $region22: #{policy_forward.1} parent=11 // pred_check_branch
        %171 = sbr.rel (%p169) target = $region24
      $region23: #{policy_forward.1} parent=11 // pred_region
        _
      $region24: #{policy_forward.1} parent=11 // pred_fallthru
        _
      // Predicated region
      $region25: #{policy_forward.1} parent=11 // pred_check
        %p172 = pneg %p122
      $region26: #{policy_forward.1} parent=11 // pred_check_branch
        %174 = sbr.rel (%p172) target = $region28
      $region27: #{policy_forward.1} parent=11 // pred_region
        _
      $region28: #{policy_forward.1} parent=11 // pred_fallthru
        _
    $region12: #{policy_forward.1} parent=5 // pred_fallthru
      _
    %p175 = scmp.lt.s32.totalorder %s12, 2
    // Predicated region
    $region29: #{policy_forward.1} parent=5 // pred_check
      %p176 = pneg %p175
    $region30: #{policy_forward.1} parent=5 // pred_check_branch
      %178 = sbr.rel (%p176) target = $region32
    $region31: #{policy_forward.1} parent=5 // pred_region
      // Predicated region
      $region33: #{policy_forward.1} parent=31 // pred_check
        %p179 = pneg %p32
      $region34: #{policy_forward.1} parent=31 // pred_check_branch
        %181 = sbr.rel (%p179) target = $region36
      $region35: #{policy_forward.1} parent=31 // pred_region
        %s182 = smul.u32 64, %s12
        %p183 = scmp.lt.s32.totalorder %s182, 127
        %s184 = scalar_select %p183, %s182, 127
        %s185 = smul.addr %s184, 8
        %s186 = scalar_lea.vmem %s0, %s185
        %s187 = smul.u32 64, %s12
      $region36: #{policy_forward.1} parent=31 // pred_fallthru
        _
    $region32: #{policy_forward.1} parent=5 // pred_fallthru
      _
    %p188 = scmp.le.s32.totalorder 1, %s12
    %p189 = scmp.lt.s32.totalorder %s12, 3
    %p190 = pnand %p188, %p189
    %p191 = pneg %p190
    // Predicated region
    $region37: #{policy_forward.1} parent=5 // pred_check
      _
    $region38: #{policy_forward.1} parent=5 // pred_check_branch
      %193 = sbr.rel (%p190) target = $region40
    $region39: #{policy_forward.1} parent=5 // pred_region
      %s194 = ssub.s32 %s12, 1
      %s195 = smul.u32 64, %s17
      %p196 = scmp.lt.s32.totalorder %s195, 127
      %s197 = scalar_select %p196, %s195, 127
      %s198 = smul.addr %s197, 8
      %s199 = scalar_lea.vmem %s0, %s198
      %p200 = pneg %p38
      %p201 = pneg %p35
      %p202 = pneg %p59
      %p203 = pneg %p56
      %p204 = pneg %p80
      %p205 = pneg %p77
      %p206 = pneg %p101
      %p207 = pneg %p98
      %p208 = pneg %p122
      %p209 = pneg %p119
      %p210 = pneg %p148
      %p211 = pneg %p145
      %s212 = smul.u32 64, %s17
      %p213 = scmp.lt.s32.totalorder %s212, 127
      %s214 = scalar_select %p213, %s212, 127
      %s215 = smul.addr %s214, 8
      %s216 = scalar_lea.vmem %s5, %s215
      %s217 = smul.u32 64, %s17
      %p218 = scmp.lt.s32.totalorder %s217, 127
      %s219 = scalar_select %p218, %s217, 127
      %s220 = smul.addr %s219, 8
      %s221 = scalar_lea.vmem %s0, %s220
      %s222 = smul.u32 64, %s17
      %s223 = smul.u32 64, %s17
      %p224 = scmp.lt.s32.totalorder %s223, 127
      %s225 = scalar_select %p224, %s223, 127
      %s226 = smul.addr %s225, 8
      %s227 = scalar_lea.vmem %s5, %s226
      %s228 = smul.u32 64, %s17
      %v229 = vld [vmem:[%s221] sm:$0xff]
      %v230 = vld [vmem:[%s221 + $0x8] sm:$0xff]
      %v231 = vld [vmem:[%s221 + $0x10] sm:$0xff]
      %v232 = vld [vmem:[%s221 + $0x18] sm:$0xff]
      %v233 = vld [vmem:[%s221 + $0x20] sm:$0xff]
      %v234 = vld [vmem:[%s221 + $0x28] sm:$0xff]
      %v235 = vld [vmem:[%s221 + $0x30] sm:$0xff]
      %v236 = vld [vmem:[%s221 + $0x38] sm:$0xff]
      %v237 = vld [vmem:[%s221 + $0x40] sm:$0xff]
      %v238 = vld [vmem:[%s221 + $0x48] sm:$0xff]
      %v239 = vld [vmem:[%s221 + $0x50] sm:$0xff]
      %v240 = vld [vmem:[%s221 + $0x58] sm:$0xff]
      %v241 = vld [vmem:[%s221 + $0x60] sm:$0xff]
      %v242 = vld [vmem:[%s221 + $0x68] sm:$0xff]
      %v243 = vld [vmem:[%s221 + $0x70] sm:$0xff]
      %v244 = vld [vmem:[%s221 + $0x78] sm:$0xff]
      %v245 = vld [vmem:[%s221 + $0x80] sm:$0xff]
      %v246 = vld [vmem:[%s221 + $0x88] sm:$0xff]
      %v247 = vld [vmem:[%s221 + $0x90] sm:$0xff]
      %v248 = vld [vmem:[%s221 + $0x98] sm:$0xff]
      %v249 = vld [vmem:[%s221 + $0xa0] sm:$0xff]
      %v250 = vld [vmem:[%s221 + $0xa8] sm:$0xff]
      %v251 = vld [vmem:[%s221 + $0xb0] sm:$0xff]
      %v252 = vld [vmem:[%s221 + $0xb8] sm:$0xff]
      %v253 = vld [vmem:[%s221 + $0xc0] sm:$0xff]
      %v254 = vld [vmem:[%s221 + $0xc8] sm:$0xff]
      %v255 = vld [vmem:[%s221 + $0xd0] sm:$0xff]
      %v256 = vld [vmem:[%s221 + $0xd8] sm:$0xff]
      %v257 = vld [vmem:[%s221 + $0xe0] sm:$0xff]
      %v258 = vld [vmem:[%s221 + $0xe8] sm:$0xff]
      %v259 = vld [vmem:[%s221 + $0xf0] sm:$0xff]
      %v260 = vld [vmem:[%s221 + $0xf8] sm:$0xff]
      %v261 = vld [vmem:[%s221 + $0x100] sm:$0xff]
      %v262 = vld [vmem:[%s221 + $0x108] sm:$0xff]
      %v263 = vld [vmem:[%s221 + $0x110] sm:$0xff]
      %v264 = vld [vmem:[%s221 + $0x118] sm:$0xff]
      %v265 = vld [vmem:[%s221 + $0x120] sm:$0xff]
      %v266 = vld [vmem:[%s221 + $0x128] sm:$0xff]
      %v267 = vld [vmem:[%s221 + $0x130] sm:$0xff]
      %v268 = vld [vmem:[%s221 + $0x138] sm:$0xff]
      %v269 = vld [vmem:[%s221 + $0x140] sm:$0xff]
      %v270 = vld [vmem:[%s221 + $0x148] sm:$0xff]
      %v271 = vld [vmem:[%s221 + $0x150] sm:$0xff]
      %v272 = vld [vmem:[%s221 + $0x158] sm:$0xff]
      %v273 = vld [vmem:[%s221 + $0x160] sm:$0xff]
      %v274 = vld [vmem:[%s221 + $0x168] sm:$0xff]
      %v275 = vld [vmem:[%s221 + $0x170] sm:$0xff]
      %v276 = vld [vmem:[%s221 + $0x178] sm:$0xff]
      %v277 = vld [vmem:[%s221 + $0x180] sm:$0xff]
      %v278 = vld [vmem:[%s221 + $0x188] sm:$0xff]
      %v279 = vld [vmem:[%s221 + $0x190] sm:$0xff]
      %v280 = vld [vmem:[%s221 + $0x198] sm:$0xff]
      %v281 = vld [vmem:[%s221 + $0x1a0] sm:$0xff]
      %v282 = vld [vmem:[%s221 + $0x1a8] sm:$0xff]
      %v283 = vld [vmem:[%s221 + $0x1b0] sm:$0xff]
      %v284 = vld [vmem:[%s221 + $0x1b8] sm:$0xff]
      %v285 = vld [vmem:[%s221 + $0x1c0] sm:$0xff]
      %v286 = vld [vmem:[%s221 + $0x1c8] sm:$0xff]
      %v287 = vld [vmem:[%s221 + $0x1d0] sm:$0xff]
      %v288 = vld [vmem:[%s221 + $0x1d8] sm:$0xff]
      %v289 = vld [vmem:[%s221 + $0x1e0] sm:$0xff]
      %v290 = vld [vmem:[%s221 + $0x1e8] sm:$0xff]
      %v291 = vld [vmem:[%s221 + $0x1f0] sm:$0xff]
      %v292 = vld [vmem:[%s221 + $0x1f8] sm:$0xff]
      %v293 = vld [vmem:[%s1] sm:$0xf]
      %v294 = vld [vmem:[%s2] sm:$0x1]
      %v296 = vperm.slane %v294, 0
      %vm298 = vcmask 31744
      %v300 = vsel %vm298, %v229, 0
      %v303 = vsel %vm298, %v230, 0
      %v306 = vsel %vm298, %v231, 0
      %v309 = vsel %vm298, %v232, 0
      %v312 = vsel %vm298, %v233, 0
      %v315 = vsel %vm298, %v234, 0
      %v318 = vsel %vm298, %v235, 0
      %v321 = vsel %vm298, %v236, 0
      %v324 = vsel %vm298, %v237, 0
      %v327 = vsel %vm298, %v238, 0
      %v330 = vsel %vm298, %v239, 0
      %v333 = vsel %vm298, %v240, 0
      %v336 = vsel %vm298, %v241, 0
      %v339 = vsel %vm298, %v242, 0
      %v342 = vsel %vm298, %v243, 0
      %v345 = vsel %vm298, %v244, 0
      %v348 = vsel %vm298, %v245, 0
      %v351 = vsel %vm298, %v246, 0
      %v354 = vsel %vm298, %v247, 0
      %v357 = vsel %vm298, %v248, 0
      %v360 = vsel %vm298, %v249, 0
      %v363 = vsel %vm298, %v250, 0
      %v366 = vsel %vm298, %v251, 0
      %v369 = vsel %vm298, %v252, 0
      %v372 = vsel %vm298, %v253, 0
      %v375 = vsel %vm298, %v254, 0
      %v378 = vsel %vm298, %v255, 0
      %v381 = vsel %vm298, %v256, 0
      %v384 = vsel %vm298, %v257, 0
      %v387 = vsel %vm298, %v258, 0
      %v390 = vsel %vm298, %v259, 0
      %v393 = vsel %vm298, %v260, 0
      %v396 = vsel %vm298, %v261, 0
      %v399 = vsel %vm298, %v262, 0
      %v402 = vsel %vm298, %v263, 0
      %v405 = vsel %vm298, %v264, 0
      %v408 = vsel %vm298, %v265, 0
      %v411 = vsel %vm298, %v266, 0
      %v414 = vsel %vm298, %v267, 0
      %v417 = vsel %vm298, %v268, 0
      %v420 = vsel %vm298, %v269, 0
      %v423 = vsel %vm298, %v270, 0
      %v426 = vsel %vm298, %v271, 0
      %v429 = vsel %vm298, %v272, 0
      %v432 = vsel %vm298, %v273, 0
      %v435 = vsel %vm298, %v274, 0
      %v438 = vsel %vm298, %v275, 0
      %v441 = vsel %vm298, %v276, 0
      %v444 = vsel %vm298, %v277, 0
      %v447 = vsel %vm298, %v278, 0
      %v450 = vsel %vm298, %v279, 0
      %v453 = vsel %vm298, %v280, 0
      %v456 = vsel %vm298, %v281, 0
      %v459 = vsel %vm298, %v282, 0
      %v462 = vsel %vm298, %v283, 0
      %v465 = vsel %vm298, %v284, 0
      %v468 = vsel %vm298, %v285, 0
      %v471 = vsel %vm298, %v286, 0
      %v474 = vsel %vm298, %v287, 0
      %v477 = vsel %vm298, %v288, 0
      %v480 = vsel %vm298, %v289, 0
      %v483 = vsel %vm298, %v290, 0
      %v486 = vsel %vm298, %v291, 0
      %v489 = vsel %vm298, %v292, 0
      %vm491 = vcmask 1043456
      %v493 = vsel %vm491, %v293, 0
      %495 = vmatpush.msra.mxu0 0.0
      %496 = vmatpush.msra.mxu0 0.0
      %497 = vmatpush.msra.mxu0 0.0
      %498 = vmatpush.msra.mxu0 0.0
      %499 = vmatpush.msra.mxu0 0.0
      %500 = vmatpush.msra.mxu0 0.0
      %501 = vmatpush.msra.mxu0 0.0
      %502 = vmatpush.msra.mxu0 0.0
      %503 = vmatpush.msra.mxu0 0.0
      %504 = vmatpush.msra.mxu0 0.0
      %505 = vmatpush.msra.mxu0 0.0
      %506 = vmatpush.msra.mxu0 0.0
      %507 = vmatpush.msra.mxu0 0.0
      %508 = vmatpush.msra.mxu0 0.0
      %509 = vmatpush.msra.mxu0 0.0
      %510 = vmatpush.msra.mxu0 %v493
      %511 = vmatmul.f32.gmra.mxu0 %v300
      %v512 = vpop.f32.mrf.mxu0
      %v513 = vadd.f32 %v296, %v512
      %514 = vmatmul.f32.gmra.mxu0 %v303
      %v515 = vpop.f32.mrf.mxu0
      %v516 = vadd.f32 %v296, %v515
      %517 = vmatmul.f32.gmra.mxu0 %v306
      %v518 = vpop.f32.mrf.mxu0
      %v519 = vadd.f32 %v296, %v518
      %520 = vmatmul.f32.gmra.mxu0 %v309
      %v521 = vpop.f32.mrf.mxu0
      %v522 = vadd.f32 %v296, %v521
      %523 = vmatmul.f32.gmra.mxu0 %v312
      %v524 = vpop.f32.mrf.mxu0
      %v525 = vadd.f32 %v296, %v524
      %526 = vmatmul.f32.gmra.mxu0 %v315
      %v527 = vpop.f32.mrf.mxu0
      %v528 = vadd.f32 %v296, %v527
      %529 = vmatmul.f32.gmra.mxu0 %v318
      %v530 = vpop.f32.mrf.mxu0
      %v531 = vadd.f32 %v296, %v530
      %532 = vmatmul.f32.gmra.mxu0 %v321
      %v533 = vpop.f32.mrf.mxu0
      %v534 = vadd.f32 %v296, %v533
      %535 = vmatmul.f32.gmra.mxu0 %v324
      %v536 = vpop.f32.mrf.mxu0
      %v537 = vadd.f32 %v296, %v536
      %538 = vmatmul.f32.gmra.mxu0 %v327
      %v539 = vpop.f32.mrf.mxu0
      %v540 = vadd.f32 %v296, %v539
      %541 = vmatmul.f32.gmra.mxu0 %v330
      %v542 = vpop.f32.mrf.mxu0
      %v543 = vadd.f32 %v296, %v542
      %544 = vmatmul.f32.gmra.mxu0 %v333
      %v545 = vpop.f32.mrf.mxu0
      %v546 = vadd.f32 %v296, %v545
      %547 = vmatmul.f32.gmra.mxu0 %v336
      %v548 = vpop.f32.mrf.mxu0
      %v549 = vadd.f32 %v296, %v548
      %550 = vmatmul.f32.gmra.mxu0 %v339
      %v551 = vpop.f32.mrf.mxu0
      %v552 = vadd.f32 %v296, %v551
      %553 = vmatmul.f32.gmra.mxu0 %v342
      %v554 = vpop.f32.mrf.mxu0
      %v555 = vadd.f32 %v296, %v554
      %556 = vmatmul.f32.gmra.mxu0 %v345
      %v557 = vpop.f32.mrf.mxu0
      %v558 = vadd.f32 %v296, %v557
      %559 = vmatmul.f32.gmra.mxu0 %v348
      %v560 = vpop.f32.mrf.mxu0
      %v561 = vadd.f32 %v296, %v560
      %562 = vmatmul.f32.gmra.mxu0 %v351
      %v563 = vpop.f32.mrf.mxu0
      %v564 = vadd.f32 %v296, %v563
      %565 = vmatmul.f32.gmra.mxu0 %v354
      %v566 = vpop.f32.mrf.mxu0
      %v567 = vadd.f32 %v296, %v566
      %568 = vmatmul.f32.gmra.mxu0 %v357
      %v569 = vpop.f32.mrf.mxu0
      %v570 = vadd.f32 %v296, %v569
      %571 = vmatmul.f32.gmra.mxu0 %v360
      %v572 = vpop.f32.mrf.mxu0
      %v573 = vadd.f32 %v296, %v572
      %574 = vmatmul.f32.gmra.mxu0 %v363
      %v575 = vpop.f32.mrf.mxu0
      %v576 = vadd.f32 %v296, %v575
      %577 = vmatmul.f32.gmra.mxu0 %v366
      %v578 = vpop.f32.mrf.mxu0
      %v579 = vadd.f32 %v296, %v578
      %580 = vmatmul.f32.gmra.mxu0 %v369
      %v581 = vpop.f32.mrf.mxu0
      %v582 = vadd.f32 %v296, %v581
      %583 = vmatmul.f32.gmra.mxu0 %v372
      %v584 = vpop.f32.mrf.mxu0
      %v585 = vadd.f32 %v296, %v584
      %586 = vmatmul.f32.gmra.mxu0 %v375
      %v587 = vpop.f32.mrf.mxu0
      %v588 = vadd.f32 %v296, %v587
      %589 = vmatmul.f32.gmra.mxu0 %v378
      %v590 = vpop.f32.mrf.mxu0
      %v591 = vadd.f32 %v296, %v590
      %592 = vmatmul.f32.gmra.mxu0 %v381
      %v593 = vpop.f32.mrf.mxu0
      %v594 = vadd.f32 %v296, %v593
      %595 = vmatmul.f32.gmra.mxu0 %v384
      %v596 = vpop.f32.mrf.mxu0
      %v597 = vadd.f32 %v296, %v596
      %598 = vmatmul.f32.gmra.mxu0 %v387
      %v599 = vpop.f32.mrf.mxu0
      %v600 = vadd.f32 %v296, %v599
      %601 = vmatmul.f32.gmra.mxu0 %v390
      %v602 = vpop.f32.mrf.mxu0
      %v603 = vadd.f32 %v296, %v602
      %604 = vmatmul.f32.gmra.mxu0 %v393
      %v605 = vpop.f32.mrf.mxu0
      %v606 = vadd.f32 %v296, %v605
      %607 = vmatmul.f32.gmra.mxu0 %v396
      %v608 = vpop.f32.mrf.mxu0
      %v609 = vadd.f32 %v296, %v608
      %610 = vmatmul.f32.gmra.mxu0 %v399
      %v611 = vpop.f32.mrf.mxu0
      %v612 = vadd.f32 %v296, %v611
      %613 = vmatmul.f32.gmra.mxu0 %v402
      %v614 = vpop.f32.mrf.mxu0
      %v615 = vadd.f32 %v296, %v614
      %616 = vmatmul.f32.gmra.mxu0 %v405
      %v617 = vpop.f32.mrf.mxu0
      %v618 = vadd.f32 %v296, %v617
      %619 = vmatmul.f32.gmra.mxu0 %v408
      %v620 = vpop.f32.mrf.mxu0
      %v621 = vadd.f32 %v296, %v620
      %622 = vmatmul.f32.gmra.mxu0 %v411
      %v623 = vpop.f32.mrf.mxu0
      %v624 = vadd.f32 %v296, %v623
      %625 = vmatmul.f32.gmra.mxu0 %v414
      %v626 = vpop.f32.mrf.mxu0
      %v627 = vadd.f32 %v296, %v626
      %628 = vmatmul.f32.gmra.mxu0 %v417
      %v629 = vpop.f32.mrf.mxu0
      %v630 = vadd.f32 %v296, %v629
      %631 = vmatmul.f32.gmra.mxu0 %v420
      %v632 = vpop.f32.mrf.mxu0
      %v633 = vadd.f32 %v296, %v632
      %634 = vmatmul.f32.gmra.mxu0 %v423
      %v635 = vpop.f32.mrf.mxu0
      %v636 = vadd.f32 %v296, %v635
      %637 = vmatmul.f32.gmra.mxu0 %v426
      %v638 = vpop.f32.mrf.mxu0
      %v639 = vadd.f32 %v296, %v638
      %640 = vmatmul.f32.gmra.mxu0 %v429
      %v641 = vpop.f32.mrf.mxu0
      %v642 = vadd.f32 %v296, %v641
      %643 = vmatmul.f32.gmra.mxu0 %v432
      %v644 = vpop.f32.mrf.mxu0
      %v645 = vadd.f32 %v296, %v644
      %646 = vmatmul.f32.gmra.mxu0 %v435
      %v647 = vpop.f32.mrf.mxu0
      %v648 = vadd.f32 %v296, %v647
      %649 = vmatmul.f32.gmra.mxu0 %v438
      %v650 = vpop.f32.mrf.mxu0
      %v651 = vadd.f32 %v296, %v650
      %652 = vmatmul.f32.gmra.mxu0 %v441
      %v653 = vpop.f32.mrf.mxu0
      %v654 = vadd.f32 %v296, %v653
      %655 = vmatmul.f32.gmra.mxu0 %v444
      %v656 = vpop.f32.mrf.mxu0
      %v657 = vadd.f32 %v296, %v656
      %658 = vmatmul.f32.gmra.mxu0 %v447
      %v659 = vpop.f32.mrf.mxu0
      %v660 = vadd.f32 %v296, %v659
      %661 = vmatmul.f32.gmra.mxu0 %v450
      %v662 = vpop.f32.mrf.mxu0
      %v663 = vadd.f32 %v296, %v662
      %664 = vmatmul.f32.gmra.mxu0 %v453
      %v665 = vpop.f32.mrf.mxu0
      %v666 = vadd.f32 %v296, %v665
      %667 = vmatmul.f32.gmra.mxu0 %v456
      %v668 = vpop.f32.mrf.mxu0
      %v669 = vadd.f32 %v296, %v668
      %670 = vmatmul.f32.gmra.mxu0 %v459
      %v671 = vpop.f32.mrf.mxu0
      %v672 = vadd.f32 %v296, %v671
      %673 = vmatmul.f32.gmra.mxu0 %v462
      %v674 = vpop.f32.mrf.mxu0
      %v675 = vadd.f32 %v296, %v674
      %676 = vmatmul.f32.gmra.mxu0 %v465
      %v677 = vpop.f32.mrf.mxu0
      %v678 = vadd.f32 %v296, %v677
      %679 = vmatmul.f32.gmra.mxu0 %v468
      %v680 = vpop.f32.mrf.mxu0
      %v681 = vadd.f32 %v296, %v680
      %682 = vmatmul.f32.gmra.mxu0 %v471
      %v683 = vpop.f32.mrf.mxu0
      %v684 = vadd.f32 %v296, %v683
      %685 = vmatmul.f32.gmra.mxu0 %v474
      %v686 = vpop.f32.mrf.mxu0
      %v687 = vadd.f32 %v296, %v686
      %688 = vmatmul.f32.gmra.mxu0 %v477
      %v689 = vpop.f32.mrf.mxu0
      %v690 = vadd.f32 %v296, %v689
      %691 = vmatmul.f32.gmra.mxu0 %v480
      %v692 = vpop.f32.mrf.mxu0
      %v693 = vadd.f32 %v296, %v692
      %694 = vmatmul.f32.gmra.mxu0 %v483
      %v695 = vpop.f32.mrf.mxu0
      %v696 = vadd.f32 %v296, %v695
      %697 = vmatmul.f32.gmra.mxu0 %v486
      %v698 = vpop.f32.mrf.mxu0
      %v699 = vadd.f32 %v296, %v698
      %700 = vmatmul.f32.gmra.mxu0 %v489
      %v701 = vpop.f32.mrf.mxu0
      %v702 = vadd.f32 %v296, %v701
      %703 = vdwg.mxu0
      %v704 = vmax.f32 %v513, 0.0
      %v705 = vmax.f32 %v516, 0.0
      %v706 = vmax.f32 %v519, 0.0
      %v707 = vmax.f32 %v522, 0.0
      %v708 = vmax.f32 %v525, 0.0
      %v709 = vmax.f32 %v528, 0.0
      %v710 = vmax.f32 %v531, 0.0
      %v711 = vmax.f32 %v534, 0.0
      %v712 = vmax.f32 %v537, 0.0
      %v713 = vmax.f32 %v540, 0.0
      %v714 = vmax.f32 %v543, 0.0
      %v715 = vmax.f32 %v546, 0.0
      %v716 = vmax.f32 %v549, 0.0
      %v717 = vmax.f32 %v552, 0.0
      %v718 = vmax.f32 %v555, 0.0
      %v719 = vmax.f32 %v558, 0.0
      %v720 = vmax.f32 %v561, 0.0
      %v721 = vmax.f32 %v564, 0.0
      %v722 = vmax.f32 %v567, 0.0
      %v723 = vmax.f32 %v570, 0.0
      %v724 = vmax.f32 %v573, 0.0
      %v725 = vmax.f32 %v576, 0.0
      %v726 = vmax.f32 %v579, 0.0
      %v727 = vmax.f32 %v582, 0.0
      %v728 = vmax.f32 %v585, 0.0
      %v729 = vmax.f32 %v588, 0.0
      %v730 = vmax.f32 %v591, 0.0
      %v731 = vmax.f32 %v594, 0.0
      %v732 = vmax.f32 %v597, 0.0
      %v733 = vmax.f32 %v600, 0.0
      %v734 = vmax.f32 %v603, 0.0
      %v735 = vmax.f32 %v606, 0.0
      %v736 = vmax.f32 %v609, 0.0
      %v737 = vmax.f32 %v612, 0.0
      %v738 = vmax.f32 %v615, 0.0
      %v739 = vmax.f32 %v618, 0.0
      %v740 = vmax.f32 %v621, 0.0
      %v741 = vmax.f32 %v624, 0.0
      %v742 = vmax.f32 %v627, 0.0
      %v743 = vmax.f32 %v630, 0.0
      %v744 = vmax.f32 %v633, 0.0
      %v745 = vmax.f32 %v636, 0.0
      %v746 = vmax.f32 %v639, 0.0
      %v747 = vmax.f32 %v642, 0.0
      %v748 = vmax.f32 %v645, 0.0
      %v749 = vmax.f32 %v648, 0.0
      %v750 = vmax.f32 %v651, 0.0
      %v751 = vmax.f32 %v654, 0.0
      %v752 = vmax.f32 %v657, 0.0
      %v753 = vmax.f32 %v660, 0.0
      %v754 = vmax.f32 %v663, 0.0
      %v755 = vmax.f32 %v666, 0.0
      %v756 = vmax.f32 %v669, 0.0
      %v757 = vmax.f32 %v672, 0.0
      %v758 = vmax.f32 %v675, 0.0
      %v759 = vmax.f32 %v678, 0.0
      %v760 = vmax.f32 %v681, 0.0
      %v761 = vmax.f32 %v684, 0.0
      %v762 = vmax.f32 %v687, 0.0
      %v763 = vmax.f32 %v690, 0.0
      %v764 = vmax.f32 %v693, 0.0
      %v765 = vmax.f32 %v696, 0.0
      %v766 = vmax.f32 %v699, 0.0
      %v767 = vmax.f32 %v702, 0.0
      %v768 = vld [vmem:[%s3] sm:$0xff]
      %v769 = vld [vmem:[%s3 + $0x8] sm:$0xff]
      %v770 = vld [vmem:[%s3 + $0x10] sm:$0xff]
      %v771 = vld [vmem:[%s3 + $0x18] sm:$0xff]
      %v772 = vld [vmem:[%s3 + $0x20] sm:$0xff]
      %v773 = vld [vmem:[%s3 + $0x28] sm:$0xff]
      %v774 = vld [vmem:[%s3 + $0x30] sm:$0xff]
      %v775 = vld [vmem:[%s3 + $0x38] sm:$0xff]
      %v776 = vld [vmem:[%s3 + $0x40] sm:$0xff]
      %v777 = vld [vmem:[%s3 + $0x48] sm:$0xff]
      %v778 = vld [vmem:[%s3 + $0x50] sm:$0xff]
      %v779 = vld [vmem:[%s3 + $0x58] sm:$0xff]
      %v780 = vld [vmem:[%s3 + $0x60] sm:$0xff]
      %v781 = vld [vmem:[%s3 + $0x68] sm:$0xff]
      %v782 = vld [vmem:[%s3 + $0x70] sm:$0xff]
      %v783 = vld [vmem:[%s3 + $0x78] sm:$0xff]
      %s784 = sld [smem:[#allocation2]]
      %v785 = vstv %s784
      %786 = vmatpush.msra.mxu0 %v783
      %787 = vmatpush.msra.mxu0 %v782
      %788 = vmatpush.msra.mxu0 %v781
      %789 = vmatpush.msra.mxu0 %v780
      %790 = vmatpush.msra.mxu0 %v779
      %791 = vmatpush.msra.mxu0 %v778
      %792 = vmatpush.msra.mxu0 %v777
      %793 = vmatpush.msra.mxu0 %v776
      %794 = vmatpush.msra.mxu0 %v775
      %795 = vmatpush.msra.mxu0 %v774
      %796 = vmatpush.msra.mxu0 %v773
      %797 = vmatpush.msra.mxu0 %v772
      %798 = vmatpush.msra.mxu0 %v771
      %799 = vmatpush.msra.mxu0 %v770
      %800 = vmatpush.msra.mxu0 %v769
      %801 = vmatpush.msra.mxu0 %v768
      %802 = vmatmul.f32.gmra.mxu0 %v704
      %v803 = vpop.f32.mrf.mxu0
      %v804 = vadd.f32 %v785, %v803
      %805 = vmatmul.f32.gmra.mxu0 %v705
      %v806 = vpop.f32.mrf.mxu0
      %v807 = vadd.f32 %v785, %v806
      %808 = vmatmul.f32.gmra.mxu0 %v706
      %v809 = vpop.f32.mrf.mxu0
      %v810 = vadd.f32 %v785, %v809
      %811 = vmatmul.f32.gmra.mxu0 %v707
      %v812 = vpop.f32.mrf.mxu0
      %v813 = vadd.f32 %v785, %v812
      %814 = vmatmul.f32.gmra.mxu0 %v708
      %v815 = vpop.f32.mrf.mxu0
      %v816 = vadd.f32 %v785, %v815
      %817 = vmatmul.f32.gmra.mxu0 %v709
      %v818 = vpop.f32.mrf.mxu0
      %v819 = vadd.f32 %v785, %v818
      %820 = vmatmul.f32.gmra.mxu0 %v710
      %v821 = vpop.f32.mrf.mxu0
      %v822 = vadd.f32 %v785, %v821
      %823 = vmatmul.f32.gmra.mxu0 %v711
      %v824 = vpop.f32.mrf.mxu0
      %v825 = vadd.f32 %v785, %v824
      %826 = vmatmul.f32.gmra.mxu0 %v712
      %v827 = vpop.f32.mrf.mxu0
      %v828 = vadd.f32 %v785, %v827
      %829 = vmatmul.f32.gmra.mxu0 %v713
      %v830 = vpop.f32.mrf.mxu0
      %v831 = vadd.f32 %v785, %v830
      %832 = vmatmul.f32.gmra.mxu0 %v714
      %v833 = vpop.f32.mrf.mxu0
      %v834 = vadd.f32 %v785, %v833
      %835 = vmatmul.f32.gmra.mxu0 %v715
      %v836 = vpop.f32.mrf.mxu0
      %v837 = vadd.f32 %v785, %v836
      %838 = vmatmul.f32.gmra.mxu0 %v716
      %v839 = vpop.f32.mrf.mxu0
      %v840 = vadd.f32 %v785, %v839
      %841 = vmatmul.f32.gmra.mxu0 %v717
      %v842 = vpop.f32.mrf.mxu0
      %v843 = vadd.f32 %v785, %v842
      %844 = vmatmul.f32.gmra.mxu0 %v718
      %v845 = vpop.f32.mrf.mxu0
      %v846 = vadd.f32 %v785, %v845
      %847 = vmatmul.f32.gmra.mxu0 %v719
      %v848 = vpop.f32.mrf.mxu0
      %v849 = vadd.f32 %v785, %v848
      %850 = vmatmul.f32.gmra.mxu0 %v720
      %v851 = vpop.f32.mrf.mxu0
      %v852 = vadd.f32 %v785, %v851
      %853 = vmatmul.f32.gmra.mxu0 %v721
      %v854 = vpop.f32.mrf.mxu0
      %v855 = vadd.f32 %v785, %v854
      %856 = vmatmul.f32.gmra.mxu0 %v722
      %v857 = vpop.f32.mrf.mxu0
      %v858 = vadd.f32 %v785, %v857
      %859 = vmatmul.f32.gmra.mxu0 %v723
      %v860 = vpop.f32.mrf.mxu0
      %v861 = vadd.f32 %v785, %v860
      %862 = vmatmul.f32.gmra.mxu0 %v724
      %v863 = vpop.f32.mrf.mxu0
      %v864 = vadd.f32 %v785, %v863
      %865 = vmatmul.f32.gmra.mxu0 %v725
      %v866 = vpop.f32.mrf.mxu0
      %v867 = vadd.f32 %v785, %v866
      %868 = vmatmul.f32.gmra.mxu0 %v726
      %v869 = vpop.f32.mrf.mxu0
      %v870 = vadd.f32 %v785, %v869
      %871 = vmatmul.f32.gmra.mxu0 %v727
      %v872 = vpop.f32.mrf.mxu0
      %v873 = vadd.f32 %v785, %v872
      %874 = vmatmul.f32.gmra.mxu0 %v728
      %v875 = vpop.f32.mrf.mxu0
      %v876 = vadd.f32 %v785, %v875
      %877 = vmatmul.f32.gmra.mxu0 %v729
      %v878 = vpop.f32.mrf.mxu0
      %v879 = vadd.f32 %v785, %v878
      %880 = vmatmul.f32.gmra.mxu0 %v730
      %v881 = vpop.f32.mrf.mxu0
      %v882 = vadd.f32 %v785, %v881
      %883 = vmatmul.f32.gmra.mxu0 %v731
      %v884 = vpop.f32.mrf.mxu0
      %v885 = vadd.f32 %v785, %v884
      %886 = vmatmul.f32.gmra.mxu0 %v732
      %v887 = vpop.f32.mrf.mxu0
      %v888 = vadd.f32 %v785, %v887
      %889 = vmatmul.f32.gmra.mxu0 %v733
      %v890 = vpop.f32.mrf.mxu0
      %v891 = vadd.f32 %v785, %v890
      %892 = vmatmul.f32.gmra.mxu0 %v734
      %v893 = vpop.f32.mrf.mxu0
      %v894 = vadd.f32 %v785, %v893
      %895 = vmatmul.f32.gmra.mxu0 %v735
      %v896 = vpop.f32.mrf.mxu0
      %v897 = vadd.f32 %v785, %v896
      %898 = vmatmul.f32.gmra.mxu0 %v736
      %v899 = vpop.f32.mrf.mxu0
      %v900 = vadd.f32 %v785, %v899
      %901 = vmatmul.f32.gmra.mxu0 %v737
      %v902 = vpop.f32.mrf.mxu0
      %v903 = vadd.f32 %v785, %v902
      %904 = vmatmul.f32.gmra.mxu0 %v738
      %v905 = vpop.f32.mrf.mxu0
      %v906 = vadd.f32 %v785, %v905
      %907 = vmatmul.f32.gmra.mxu0 %v739
      %v908 = vpop.f32.mrf.mxu0
      %v909 = vadd.f32 %v785, %v908
      %910 = vmatmul.f32.gmra.mxu0 %v740
      %v911 = vpop.f32.mrf.mxu0
      %v912 = vadd.f32 %v785, %v911
      %913 = vmatmul.f32.gmra.mxu0 %v741
      %v914 = vpop.f32.mrf.mxu0
      %v915 = vadd.f32 %v785, %v914
      %916 = vmatmul.f32.gmra.mxu0 %v742
      %v917 = vpop.f32.mrf.mxu0
      %v918 = vadd.f32 %v785, %v917
      %919 = vmatmul.f32.gmra.mxu0 %v743
      %v920 = vpop.f32.mrf.mxu0
      %v921 = vadd.f32 %v785, %v920
      %922 = vmatmul.f32.gmra.mxu0 %v744
      %v923 = vpop.f32.mrf.mxu0
      %v924 = vadd.f32 %v785, %v923
      %925 = vmatmul.f32.gmra.mxu0 %v745
      %v926 = vpop.f32.mrf.mxu0
      %v927 = vadd.f32 %v785, %v926
      %928 = vmatmul.f32.gmra.mxu0 %v746
      %v929 = vpop.f32.mrf.mxu0
      %v930 = vadd.f32 %v785, %v929
      %931 = vmatmul.f32.gmra.mxu0 %v747
      %v932 = vpop.f32.mrf.mxu0
      %v933 = vadd.f32 %v785, %v932
      %934 = vmatmul.f32.gmra.mxu0 %v748
      %v935 = vpop.f32.mrf.mxu0
      %v936 = vadd.f32 %v785, %v935
      %937 = vmatmul.f32.gmra.mxu0 %v749
      %v938 = vpop.f32.mrf.mxu0
      %v939 = vadd.f32 %v785, %v938
      %940 = vmatmul.f32.gmra.mxu0 %v750
      %v941 = vpop.f32.mrf.mxu0
      %v942 = vadd.f32 %v785, %v941
      %943 = vmatmul.f32.gmra.mxu0 %v751
      %v944 = vpop.f32.mrf.mxu0
      %v945 = vadd.f32 %v785, %v944
      %946 = vmatmul.f32.gmra.mxu0 %v752
      %v947 = vpop.f32.mrf.mxu0
      %v948 = vadd.f32 %v785, %v947
      %949 = vmatmul.f32.gmra.mxu0 %v753
      %v950 = vpop.f32.mrf.mxu0
      %v951 = vadd.f32 %v785, %v950
      %952 = vmatmul.f32.gmra.mxu0 %v754
      %v953 = vpop.f32.mrf.mxu0
      %v954 = vadd.f32 %v785, %v953
      %955 = vmatmul.f32.gmra.mxu0 %v755
      %v956 = vpop.f32.mrf.mxu0
      %v957 = vadd.f32 %v785, %v956
      %958 = vmatmul.f32.gmra.mxu0 %v756
      %v959 = vpop.f32.mrf.mxu0
      %v960 = vadd.f32 %v785, %v959
      %961 = vmatmul.f32.gmra.mxu0 %v757
      %v962 = vpop.f32.mrf.mxu0
      %v963 = vadd.f32 %v785, %v962
      %964 = vmatmul.f32.gmra.mxu0 %v758
      %v965 = vpop.f32.mrf.mxu0
      %v966 = vadd.f32 %v785, %v965
      %967 = vmatmul.f32.gmra.mxu0 %v759
      %v968 = vpop.f32.mrf.mxu0
      %v969 = vadd.f32 %v785, %v968
      %970 = vmatmul.f32.gmra.mxu0 %v760
      %v971 = vpop.f32.mrf.mxu0
      %v972 = vadd.f32 %v785, %v971
      %973 = vmatmul.f32.gmra.mxu0 %v761
      %v974 = vpop.f32.mrf.mxu0
      %v975 = vadd.f32 %v785, %v974
      %976 = vmatmul.f32.gmra.mxu0 %v762
      %v977 = vpop.f32.mrf.mxu0
      %v978 = vadd.f32 %v785, %v977
      %979 = vmatmul.f32.gmra.mxu0 %v763
      %v980 = vpop.f32.mrf.mxu0
      %v981 = vadd.f32 %v785, %v980
      %982 = vmatmul.f32.gmra.mxu0 %v764
      %v983 = vpop.f32.mrf.mxu0
      %v984 = vadd.f32 %v785, %v983
      %985 = vmatmul.f32.gmra.mxu0 %v765
      %v986 = vpop.f32.mrf.mxu0
      %v987 = vadd.f32 %v785, %v986
      %988 = vmatmul.f32.gmra.mxu0 %v766
      %v989 = vpop.f32.mrf.mxu0
      %v990 = vadd.f32 %v785, %v989
      %991 = vmatmul.f32.gmra.mxu0 %v767
      %v992 = vpop.f32.mrf.mxu0
      %v993 = vadd.f32 %v785, %v992
      %994 = vdwg.mxu0
      %v995 = vand.u32 2147483647, %v804
      %v996 = vand.u32 2147483647, %v807
      %v997 = vand.u32 2147483647, %v810
      %v998 = vand.u32 2147483647, %v813
      %v999 = vand.u32 2147483647, %v816
      %v1000 = vand.u32 2147483647, %v819
      %v1001 = vand.u32 2147483647, %v822
      %v1002 = vand.u32 2147483647, %v825
      %v1003 = vand.u32 2147483647, %v828
      %v1004 = vand.u32 2147483647, %v831
      %v1005 = vand.u32 2147483647, %v834
      %v1006 = vand.u32 2147483647, %v837
      %v1007 = vand.u32 2147483647, %v840
      %v1008 = vand.u32 2147483647, %v843
      %v1009 = vand.u32 2147483647, %v846
      %v1010 = vand.u32 2147483647, %v849
      %v1011 = vand.u32 2147483647, %v852
      %v1012 = vand.u32 2147483647, %v855
      %v1013 = vand.u32 2147483647, %v858
      %v1014 = vand.u32 2147483647, %v861
      %v1015 = vand.u32 2147483647, %v864
      %v1016 = vand.u32 2147483647, %v867
      %v1017 = vand.u32 2147483647, %v870
      %v1018 = vand.u32 2147483647, %v873
      %v1019 = vand.u32 2147483647, %v876
      %v1020 = vand.u32 2147483647, %v879
      %v1021 = vand.u32 2147483647, %v882
      %v1022 = vand.u32 2147483647, %v885
      %v1023 = vand.u32 2147483647, %v888
      %v1024 = vand.u32 2147483647, %v891
      %v1025 = vand.u32 2147483647, %v894
      %v1026 = vand.u32 2147483647, %v897
      %v1027 = vand.u32 2147483647, %v900
      %v1028 = vand.u32 2147483647, %v903
      %v1029 = vand.u32 2147483647, %v906
      %v1030 = vand.u32 2147483647, %v909
      %v1031 = vand.u32 2147483647, %v912
      %v1032 = vand.u32 2147483647, %v915
      %v1033 = vand.u32 2147483647, %v918
      %v1034 = vand.u32 2147483647, %v921
      %v1035 = vand.u32 2147483647, %v924
      %v1036 = vand.u32 2147483647, %v927
      %v1037 = vand.u32 2147483647, %v930
      %v1038 = vand.u32 2147483647, %v933
      %v1039 = vand.u32 2147483647, %v936
      %v1040 = vand.u32 2147483647, %v939
      %v1041 = vand.u32 2147483647, %v942
      %v1042 = vand.u32 2147483647, %v945
      %v1043 = vand.u32 2147483647, %v948
      %v1044 = vand.u32 2147483647, %v951
      %v1045 = vand.u32 2147483647, %v954
      %v1046 = vand.u32 2147483647, %v957
      %v1047 = vand.u32 2147483647, %v960
      %v1048 = vand.u32 2147483647, %v963
      %v1049 = vand.u32 2147483647, %v966
      %v1050 = vand.u32 2147483647, %v969
      %v1051 = vand.u32 2147483647, %v972
      %v1052 = vand.u32 2147483647, %v975
      %v1053 = vand.u32 2147483647, %v978
      %v1054 = vand.u32 2147483647, %v981
      %v1055 = vand.u32 2147483647, %v984
      %v1056 = vand.u32 2147483647, %v987
      %v1057 = vand.u32 2147483647, %v990
      %v1058 = vand.u32 2147483647, %v993
      %v1059 = vsub.f32 0.0, %v995
      %v1060 = vsub.f32 0.0, %v996
      %v1061 = vsub.f32 0.0, %v997
      %v1062 = vsub.f32 0.0, %v998
      %v1063 = vsub.f32 0.0, %v999
      %v1064 = vsub.f32 0.0, %v1000
      %v1065 = vsub.f32 0.0, %v1001
      %v1066 = vsub.f32 0.0, %v1002
      %v1067 = vsub.f32 0.0, %v1003
      %v1068 = vsub.f32 0.0, %v1004
      %v1069 = vsub.f32 0.0, %v1005
      %v1070 = vsub.f32 0.0, %v1006
      %v1071 = vsub.f32 0.0, %v1007
      %v1072 = vsub.f32 0.0, %v1008
      %v1073 = vsub.f32 0.0, %v1009
      %v1074 = vsub.f32 0.0, %v1010
      %v1075 = vsub.f32 0.0, %v1011
      %v1076 = vsub.f32 0.0, %v1012
      %v1077 = vsub.f32 0.0, %v1013
      %v1078 = vsub.f32 0.0, %v1014
      %v1079 = vsub.f32 0.0, %v1015
      %v1080 = vsub.f32 0.0, %v1016
      %v1081 = vsub.f32 0.0, %v1017
      %v1082 = vsub.f32 0.0, %v1018
      %v1083 = vsub.f32 0.0, %v1019
      %v1084 = vsub.f32 0.0, %v1020
      %v1085 = vsub.f32 0.0, %v1021
      %v1086 = vsub.f32 0.0, %v1022
      %v1087 = vsub.f32 0.0, %v1023
      %v1088 = vsub.f32 0.0, %v1024
      %v1089 = vsub.f32 0.0, %v1025
      %v1090 = vsub.f32 0.0, %v1026
      %v1091 = vsub.f32 0.0, %v1027
      %v1092 = vsub.f32 0.0, %v1028
      %v1093 = vsub.f32 0.0, %v1029
      %v1094 = vsub.f32 0.0, %v1030
      %v1095 = vsub.f32 0.0, %v1031
      %v1096 = vsub.f32 0.0, %v1032
      %v1097 = vsub.f32 0.0, %v1033
      %v1098 = vsub.f32 0.0, %v1034
      %v1099 = vsub.f32 0.0, %v1035
      %v1100 = vsub.f32 0.0, %v1036
      %v1101 = vsub.f32 0.0, %v1037
      %v1102 = vsub.f32 0.0, %v1038
      %v1103 = vsub.f32 0.0, %v1039
      %v1104 = vsub.f32 0.0, %v1040
      %v1105 = vsub.f32 0.0, %v1041
      %v1106 = vsub.f32 0.0, %v1042
      %v1107 = vsub.f32 0.0, %v1043
      %v1108 = vsub.f32 0.0, %v1044
      %v1109 = vsub.f32 0.0, %v1045
      %v1110 = vsub.f32 0.0, %v1046
      %v1111 = vsub.f32 0.0, %v1047
      %v1112 = vsub.f32 0.0, %v1048
      %v1113 = vsub.f32 0.0, %v1049
      %v1114 = vsub.f32 0.0, %v1050
      %v1115 = vsub.f32 0.0, %v1051
      %v1116 = vsub.f32 0.0, %v1052
      %v1117 = vsub.f32 0.0, %v1053
      %v1118 = vsub.f32 0.0, %v1054
      %v1119 = vsub.f32 0.0, %v1055
      %v1120 = vsub.f32 0.0, %v1056
      %v1121 = vsub.f32 0.0, %v1057
      %v1122 = vsub.f32 0.0, %v1058
      %v1123 = vmul.f32 %v1059, 1.442695
      %v1124 = vpow.pop %v1123
      %v1125 = vmul.f32 %v1060, 1.442695
      %v1126 = vpow.pop %v1125
      %v1127 = vmul.f32 %v1061, 1.442695
      %v1128 = vpow.pop %v1127
      %v1129 = vmul.f32 %v1062, 1.442695
      %v1130 = vpow.pop %v1129
      %v1131 = vmul.f32 %v1063, 1.442695
      %v1132 = vpow.pop %v1131
      %v1133 = vmul.f32 %v1064, 1.442695
      %v1134 = vpow.pop %v1133
      %v1135 = vmul.f32 %v1065, 1.442695
      %v1136 = vpow.pop %v1135
      %v1137 = vmul.f32 %v1066, 1.442695
      %v1138 = vpow.pop %v1137
      %v1139 = vmul.f32 %v1067, 1.442695
      %v1140 = vpow.pop %v1139
      %v1141 = vmul.f32 %v1068, 1.442695
      %v1142 = vpow.pop %v1141
      %v1143 = vmul.f32 %v1069, 1.442695
      %v1144 = vpow.pop %v1143
      %v1145 = vmul.f32 %v1070, 1.442695
      %v1146 = vpow.pop %v1145
      %v1147 = vmul.f32 %v1071, 1.442695
      %v1148 = vpow.pop %v1147
      %v1149 = vmul.f32 %v1072, 1.442695
      %v1150 = vpow.pop %v1149
      %v1151 = vmul.f32 %v1073, 1.442695
      %v1152 = vpow.pop %v1151
      %v1153 = vmul.f32 %v1074, 1.442695
      %v1154 = vpow.pop %v1153
      %v1155 = vmul.f32 %v1075, 1.442695
      %v1156 = vpow.pop %v1155
      %v1157 = vmul.f32 %v1076, 1.442695
      %v1158 = vpow.pop %v1157
      %v1159 = vmul.f32 %v1077, 1.442695
      %v1160 = vpow.pop %v1159
      %v1161 = vmul.f32 %v1078, 1.442695
      %v1162 = vpow.pop %v1161
      %v1163 = vmul.f32 %v1079, 1.442695
      %v1164 = vpow.pop %v1163
      %v1165 = vmul.f32 %v1080, 1.442695
      %v1166 = vpow.pop %v1165
      %v1167 = vmul.f32 %v1081, 1.442695
      %v1168 = vpow.pop %v1167
      %v1169 = vmul.f32 %v1082, 1.442695
      %v1170 = vpow.pop %v1169
      %v1171 = vmul.f32 %v1083, 1.442695
      %v1172 = vpow.pop %v1171
      %v1173 = vmul.f32 %v1084, 1.442695
      %v1174 = vpow.pop %v1173
      %v1175 = vmul.f32 %v1085, 1.442695
      %v1176 = vpow.pop %v1175
      %v1177 = vmul.f32 %v1086, 1.442695
      %v1178 = vpow.pop %v1177
      %v1179 = vmul.f32 %v1087, 1.442695
      %v1180 = vpow.pop %v1179
      %v1181 = vmul.f32 %v1088, 1.442695
      %v1182 = vpow.pop %v1181
      %v1183 = vmul.f32 %v1089, 1.442695
      %v1184 = vpow.pop %v1183
      %v1185 = vmul.f32 %v1090, 1.442695
      %v1186 = vpow.pop %v1185
      %v1187 = vmul.f32 %v1091, 1.442695
      %v1188 = vpow.pop %v1187
      %v1189 = vmul.f32 %v1092, 1.442695
      %v1190 = vpow.pop %v1189
      %v1191 = vmul.f32 %v1093, 1.442695
      %v1192 = vpow.pop %v1191
      %v1193 = vmul.f32 %v1094, 1.442695
      %v1194 = vpow.pop %v1193
      %v1195 = vmul.f32 %v1095, 1.442695
      %v1196 = vpow.pop %v1195
      %v1197 = vmul.f32 %v1096, 1.442695
      %v1198 = vpow.pop %v1197
      %v1199 = vmul.f32 %v1097, 1.442695
      %v1200 = vpow.pop %v1199
      %v1201 = vmul.f32 %v1098, 1.442695
      %v1202 = vpow.pop %v1201
      %v1203 = vmul.f32 %v1099, 1.442695
      %v1204 = vpow.pop %v1203
      %v1205 = vmul.f32 %v1100, 1.442695
      %v1206 = vpow.pop %v1205
      %v1207 = vmul.f32 %v1101, 1.442695
      %v1208 = vpow.pop %v1207
      %v1209 = vmul.f32 %v1102, 1.442695
      %v1210 = vpow.pop %v1209
      %v1211 = vmul.f32 %v1103, 1.442695
      %v1212 = vpow.pop %v1211
      %v1213 = vmul.f32 %v1104, 1.442695
      %v1214 = vpow.pop %v1213
      %v1215 = vmul.f32 %v1105, 1.442695
      %v1216 = vpow.pop %v1215
      %v1217 = vmul.f32 %v1106, 1.442695
      %v1218 = vpow.pop %v1217
      %v1219 = vmul.f32 %v1107, 1.442695
      %v1220 = vpow.pop %v1219
      %v1221 = vmul.f32 %v1108, 1.442695
      %v1222 = vpow.pop %v1221
      %v1223 = vmul.f32 %v1109, 1.442695
      %v1224 = vpow.pop %v1223
      %v1225 = vmul.f32 %v1110, 1.442695
      %v1226 = vpow.pop %v1225
      %v1227 = vmul.f32 %v1111, 1.442695
      %v1228 = vpow.pop %v1227
      %v1229 = vmul.f32 %v1112, 1.442695
      %v1230 = vpow.pop %v1229
      %v1231 = vmul.f32 %v1113, 1.442695
      %v1232 = vpow.pop %v1231
      %v1233 = vmul.f32 %v1114, 1.442695
      %v1234 = vpow.pop %v1233
      %v1235 = vmul.f32 %v1115, 1.442695
      %v1236 = vpow.pop %v1235
      %v1237 = vmul.f32 %v1116, 1.442695
      %v1238 = vpow.pop %v1237
      %v1239 = vmul.f32 %v1117, 1.442695
      %v1240 = vpow.pop %v1239
      %v1241 = vmul.f32 %v1118, 1.442695
      %v1242 = vpow.pop %v1241
      %v1243 = vmul.f32 %v1119, 1.442695
      %v1244 = vpow.pop %v1243
      %v1245 = vmul.f32 %v1120, 1.442695
      %v1246 = vpow.pop %v1245
      %v1247 = vmul.f32 %v1121, 1.442695
      %v1248 = vpow.pop %v1247
      %v1249 = vmul.f32 %v1122, 1.442695
      %v1250 = vpow.pop %v1249
      %v1251 = vadd.f32 %v1124, 1.0
      %v1252 = vadd.f32 %v1126, 1.0
      %v1253 = vadd.f32 %v1128, 1.0
      %v1254 = vadd.f32 %v1130, 1.0
      %v1255 = vadd.f32 %v1132, 1.0
      %v1256 = vadd.f32 %v1134, 1.0
      %v1257 = vadd.f32 %v1136, 1.0
      %v1258 = vadd.f32 %v1138, 1.0
      %v1259 = vadd.f32 %v1140, 1.0
      %v1260 = vadd.f32 %v1142, 1.0
      %v1261 = vadd.f32 %v1144, 1.0
      %v1262 = vadd.f32 %v1146, 1.0
      %v1263 = vadd.f32 %v1148, 1.0
      %v1264 = vadd.f32 %v1150, 1.0
      %v1265 = vadd.f32 %v1152, 1.0
      %v1266 = vadd.f32 %v1154, 1.0
      %v1267 = vadd.f32 %v1156, 1.0
      %v1268 = vadd.f32 %v1158, 1.0
      %v1269 = vadd.f32 %v1160, 1.0
      %v1270 = vadd.f32 %v1162, 1.0
      %v1271 = vadd.f32 %v1164, 1.0
      %v1272 = vadd.f32 %v1166, 1.0
      %v1273 = vadd.f32 %v1168, 1.0
      %v1274 = vadd.f32 %v1170, 1.0
      %v1275 = vadd.f32 %v1172, 1.0
      %v1276 = vadd.f32 %v1174, 1.0
      %v1277 = vadd.f32 %v1176, 1.0
      %v1278 = vadd.f32 %v1178, 1.0
      %v1279 = vadd.f32 %v1180, 1.0
      %v1280 = vadd.f32 %v1182, 1.0
      %v1281 = vadd.f32 %v1184, 1.0
      %v1282 = vadd.f32 %v1186, 1.0
      %v1283 = vadd.f32 %v1188, 1.0
      %v1284 = vadd.f32 %v1190, 1.0
      %v1285 = vadd.f32 %v1192, 1.0
      %v1286 = vadd.f32 %v1194, 1.0
      %v1287 = vadd.f32 %v1196, 1.0
      %v1288 = vadd.f32 %v1198, 1.0
      %v1289 = vadd.f32 %v1200, 1.0
      %v1290 = vadd.f32 %v1202, 1.0
      %v1291 = vadd.f32 %v1204, 1.0
      %v1292 = vadd.f32 %v1206, 1.0
      %v1293 = vadd.f32 %v1208, 1.0
      %v1294 = vadd.f32 %v1210, 1.0
      %v1295 = vadd.f32 %v1212, 1.0
      %v1296 = vadd.f32 %v1214, 1.0
      %v1297 = vadd.f32 %v1216, 1.0
      %v1298 = vadd.f32 %v1218, 1.0
      %v1299 = vadd.f32 %v1220, 1.0
      %v1300 = vadd.f32 %v1222, 1.0
      %v1301 = vadd.f32 %v1224, 1.0
      %v1302 = vadd.f32 %v1226, 1.0
      %v1303 = vadd.f32 %v1228, 1.0
      %v1304 = vadd.f32 %v1230, 1.0
      %v1305 = vadd.f32 %v1232, 1.0
      %v1306 = vadd.f32 %v1234, 1.0
      %v1307 = vadd.f32 %v1236, 1.0
      %v1308 = vadd.f32 %v1238, 1.0
      %v1309 = vadd.f32 %v1240, 1.0
      %v1310 = vadd.f32 %v1242, 1.0
      %v1311 = vadd.f32 %v1244, 1.0
      %v1312 = vadd.f32 %v1246, 1.0
      %v1313 = vadd.f32 %v1248, 1.0
      %v1314 = vadd.f32 %v1250, 1.0
      %v1315 = vrcp.pop %v1251
      %v1316 = vmul.f32 %v1251, %v1315
      %v1317 = vsub.f32 1.0, %v1316
      %v1318 = vmul.f32 %v1315, %v1317
      %v1319 = vadd.f32 %v1315, %v1318
      %vm1320 = vweird.f32 %v1251
      %vm1321 = vweird.f32 %v1315
      %vm1322 = vmor %vm1320, %vm1321
      %v1323 = vsel %vm1322, %v1315, %v1319
      %v1324 = vand.u32 2147483647, %v1251
      %vm1325 = vcmp.eq.f32.partialorder %v1324, 8.507059e+37
      %v1326 = vand.u32 %v1251, 2147483648
      %v1327 = vor.u32 1.1754944e-38, %v1326
      %v1328 = vsel %vm1325, %v1327, %v1323
      %v1329 = vmul.f32 1.0, %v1328
      %v1330 = vrcp.pop %v1252
      %v1331 = vmul.f32 %v1252, %v1330
      %v1332 = vsub.f32 1.0, %v1331
      %v1333 = vmul.f32 %v1330, %v1332
      %v1334 = vadd.f32 %v1330, %v1333
      %vm1335 = vweird.f32 %v1252
      %vm1336 = vweird.f32 %v1330
      %vm1337 = vmor %vm1335, %vm1336
      %v1338 = vsel %vm1337, %v1330, %v1334
      %v1339 = vand.u32 2147483647, %v1252
      %vm1340 = vcmp.eq.f32.partialorder %v1339, 8.507059e+37
      %v1341 = vand.u32 %v1252, 2147483648
      %v1342 = vor.u32 1.1754944e-38, %v1341
      %v1343 = vsel %vm1340, %v1342, %v1338
      %v1344 = vmul.f32 1.0, %v1343
      %v1345 = vrcp.pop %v1253
      %v1346 = vmul.f32 %v1253, %v1345
      %v1347 = vsub.f32 1.0, %v1346
      %v1348 = vmul.f32 %v1345, %v1347
      %v1349 = vadd.f32 %v1345, %v1348
      %vm1350 = vweird.f32 %v1253
      %vm1351 = vweird.f32 %v1345
      %vm1352 = vmor %vm1350, %vm1351
      %v1353 = vsel %vm1352, %v1345, %v1349
      %v1354 = vand.u32 2147483647, %v1253
      %vm1355 = vcmp.eq.f32.partialorder %v1354, 8.507059e+37
      %v1356 = vand.u32 %v1253, 2147483648
      %v1357 = vor.u32 1.1754944e-38, %v1356
      %v1358 = vsel %vm1355, %v1357, %v1353
      %v1359 = vmul.f32 1.0, %v1358
      %v1360 = vrcp.pop %v1254
      %v1361 = vmul.f32 %v1254, %v1360
      %v1362 = vsub.f32 1.0, %v1361
      %v1363 = vmul.f32 %v1360, %v1362
      %v1364 = vadd.f32 %v1360, %v1363
      %vm1365 = vweird.f32 %v1254
      %vm1366 = vweird.f32 %v1360
      %vm1367 = vmor %vm1365, %vm1366
      %v1368 = vsel %vm1367, %v1360, %v1364
      %v1369 = vand.u32 2147483647, %v1254
      %vm1370 = vcmp.eq.f32.partialorder %v1369, 8.507059e+37
      %v1371 = vand.u32 %v1254, 2147483648
      %v1372 = vor.u32 1.1754944e-38, %v1371
      %v1373 = vsel %vm1370, %v1372, %v1368
      %v1374 = vmul.f32 1.0, %v1373
      %v1375 = vrcp.pop %v1255
      %v1376 = vmul.f32 %v1255, %v1375
      %v1377 = vsub.f32 1.0, %v1376
      %v1378 = vmul.f32 %v1375, %v1377
      %v1379 = vadd.f32 %v1375, %v1378
      %vm1380 = vweird.f32 %v1255
      %vm1381 = vweird.f32 %v1375
      %vm1382 = vmor %vm1380, %vm1381
      %v1383 = vsel %vm1382, %v1375, %v1379
      %v1384 = vand.u32 2147483647, %v1255
      %vm1385 = vcmp.eq.f32.partialorder %v1384, 8.507059e+37
      %v1386 = vand.u32 %v1255, 2147483648
      %v1387 = vor.u32 1.1754944e-38, %v1386
      %v1388 = vsel %vm1385, %v1387, %v1383
      %v1389 = vmul.f32 1.0, %v1388
      %v1390 = vrcp.pop %v1256
      %v1391 = vmul.f32 %v1256, %v1390
      %v1392 = vsub.f32 1.0, %v1391
      %v1393 = vmul.f32 %v1390, %v1392
      %v1394 = vadd.f32 %v1390, %v1393
      %vm1395 = vweird.f32 %v1256
      %vm1396 = vweird.f32 %v1390
      %vm1397 = vmor %vm1395, %vm1396
      %v1398 = vsel %vm1397, %v1390, %v1394
      %v1399 = vand.u32 2147483647, %v1256
      %vm1400 = vcmp.eq.f32.partialorder %v1399, 8.507059e+37
      %v1401 = vand.u32 %v1256, 2147483648
      %v1402 = vor.u32 1.1754944e-38, %v1401
      %v1403 = vsel %vm1400, %v1402, %v1398
      %v1404 = vmul.f32 1.0, %v1403
      %v1405 = vrcp.pop %v1257
      %v1406 = vmul.f32 %v1257, %v1405
      %v1407 = vsub.f32 1.0, %v1406
      %v1408 = vmul.f32 %v1405, %v1407
      %v1409 = vadd.f32 %v1405, %v1408
      %vm1410 = vweird.f32 %v1257
      %vm1411 = vweird.f32 %v1405
      %vm1412 = vmor %vm1410, %vm1411
      %v1413 = vsel %vm1412, %v1405, %v1409
      %v1414 = vand.u32 2147483647, %v1257
      %vm1415 = vcmp.eq.f32.partialorder %v1414, 8.507059e+37
      %v1416 = vand.u32 %v1257, 2147483648
      %v1417 = vor.u32 1.1754944e-38, %v1416
      %v1418 = vsel %vm1415, %v1417, %v1413
      %v1419 = vmul.f32 1.0, %v1418
      %v1420 = vrcp.pop %v1258
      %v1421 = vmul.f32 %v1258, %v1420
      %v1422 = vsub.f32 1.0, %v1421
      %v1423 = vmul.f32 %v1420, %v1422
      %v1424 = vadd.f32 %v1420, %v1423
      %vm1425 = vweird.f32 %v1258
      %vm1426 = vweird.f32 %v1420
      %vm1427 = vmor %vm1425, %vm1426
      %v1428 = vsel %vm1427, %v1420, %v1424
      %v1429 = vand.u32 2147483647, %v1258
      %vm1430 = vcmp.eq.f32.partialorder %v1429, 8.507059e+37
      %v1431 = vand.u32 %v1258, 2147483648
      %v1432 = vor.u32 1.1754944e-38, %v1431
      %v1433 = vsel %vm1430, %v1432, %v1428
      %v1434 = vmul.f32 1.0, %v1433
      %v1435 = vrcp.pop %v1259
      %v1436 = vmul.f32 %v1259, %v1435
      %v1437 = vsub.f32 1.0, %v1436
      %v1438 = vmul.f32 %v1435, %v1437
      %v1439 = vadd.f32 %v1435, %v1438
      %vm1440 = vweird.f32 %v1259
      %vm1441 = vweird.f32 %v1435
      %vm1442 = vmor %vm1440, %vm1441
      %v1443 = vsel %vm1442, %v1435, %v1439
      %v1444 = vand.u32 2147483647, %v1259
      %vm1445 = vcmp.eq.f32.partialorder %v1444, 8.507059e+37
      %v1446 = vand.u32 %v1259, 2147483648
      %v1447 = vor.u32 1.1754944e-38, %v1446
      %v1448 = vsel %vm1445, %v1447, %v1443
      %v1449 = vmul.f32 1.0, %v1448
      %v1450 = vrcp.pop %v1260
      %v1451 = vmul.f32 %v1260, %v1450
      %v1452 = vsub.f32 1.0, %v1451
      %v1453 = vmul.f32 %v1450, %v1452
      %v1454 = vadd.f32 %v1450, %v1453
      %vm1455 = vweird.f32 %v1260
      %vm1456 = vweird.f32 %v1450
      %vm1457 = vmor %vm1455, %vm1456
      %v1458 = vsel %vm1457, %v1450, %v1454
      %v1459 = vand.u32 2147483647, %v1260
      %vm1460 = vcmp.eq.f32.partialorder %v1459, 8.507059e+37
      %v1461 = vand.u32 %v1260, 2147483648
      %v1462 = vor.u32 1.1754944e-38, %v1461
      %v1463 = vsel %vm1460, %v1462, %v1458
      %v1464 = vmul.f32 1.0, %v1463
      %v1465 = vrcp.pop %v1261
      %v1466 = vmul.f32 %v1261, %v1465
      %v1467 = vsub.f32 1.0, %v1466
      %v1468 = vmul.f32 %v1465, %v1467
      %v1469 = vadd.f32 %v1465, %v1468
      %vm1470 = vweird.f32 %v1261
      %vm1471 = vweird.f32 %v1465
      %vm1472 = vmor %vm1470, %vm1471
      %v1473 = vsel %vm1472, %v1465, %v1469
      %v1474 = vand.u32 2147483647, %v1261
      %vm1475 = vcmp.eq.f32.partialorder %v1474, 8.507059e+37
      %v1476 = vand.u32 %v1261, 2147483648
      %v1477 = vor.u32 1.1754944e-38, %v1476
      %v1478 = vsel %vm1475, %v1477, %v1473
      %v1479 = vmul.f32 1.0, %v1478
      %v1480 = vrcp.pop %v1262
      %v1481 = vmul.f32 %v1262, %v1480
      %v1482 = vsub.f32 1.0, %v1481
      %v1483 = vmul.f32 %v1480, %v1482
      %v1484 = vadd.f32 %v1480, %v1483
      %vm1485 = vweird.f32 %v1262
      %vm1486 = vweird.f32 %v1480
      %vm1487 = vmor %vm1485, %vm1486
      %v1488 = vsel %vm1487, %v1480, %v1484
      %v1489 = vand.u32 2147483647, %v1262
      %vm1490 = vcmp.eq.f32.partialorder %v1489, 8.507059e+37
      %v1491 = vand.u32 %v1262, 2147483648
      %v1492 = vor.u32 1.1754944e-38, %v1491
      %v1493 = vsel %vm1490, %v1492, %v1488
      %v1494 = vmul.f32 1.0, %v1493
      %v1495 = vrcp.pop %v1263
      %v1496 = vmul.f32 %v1263, %v1495
      %v1497 = vsub.f32 1.0, %v1496
      %v1498 = vmul.f32 %v1495, %v1497
      %v1499 = vadd.f32 %v1495, %v1498
      %vm1500 = vweird.f32 %v1263
      %vm1501 = vweird.f32 %v1495
      %vm1502 = vmor %vm1500, %vm1501
      %v1503 = vsel %vm1502, %v1495, %v1499
      %v1504 = vand.u32 2147483647, %v1263
      %vm1505 = vcmp.eq.f32.partialorder %v1504, 8.507059e+37
      %v1506 = vand.u32 %v1263, 2147483648
      %v1507 = vor.u32 1.1754944e-38, %v1506
      %v1508 = vsel %vm1505, %v1507, %v1503
      %v1509 = vmul.f32 1.0, %v1508
      %v1510 = vrcp.pop %v1264
      %v1511 = vmul.f32 %v1264, %v1510
      %v1512 = vsub.f32 1.0, %v1511
      %v1513 = vmul.f32 %v1510, %v1512
      %v1514 = vadd.f32 %v1510, %v1513
      %vm1515 = vweird.f32 %v1264
      %vm1516 = vweird.f32 %v1510
      %vm1517 = vmor %vm1515, %vm1516
      %v1518 = vsel %vm1517, %v1510, %v1514
      %v1519 = vand.u32 2147483647, %v1264
      %vm1520 = vcmp.eq.f32.partialorder %v1519, 8.507059e+37
      %v1521 = vand.u32 %v1264, 2147483648
      %v1522 = vor.u32 1.1754944e-38, %v1521
      %v1523 = vsel %vm1520, %v1522, %v1518
      %v1524 = vmul.f32 1.0, %v1523
      %v1525 = vrcp.pop %v1265
      %v1526 = vmul.f32 %v1265, %v1525
      %v1527 = vsub.f32 1.0, %v1526
      %v1528 = vmul.f32 %v1525, %v1527
      %v1529 = vadd.f32 %v1525, %v1528
      %vm1530 = vweird.f32 %v1265
      %vm1531 = vweird.f32 %v1525
      %vm1532 = vmor %vm1530, %vm1531
      %v1533 = vsel %vm1532, %v1525, %v1529
      %v1534 = vand.u32 2147483647, %v1265
      %vm1535 = vcmp.eq.f32.partialorder %v1534, 8.507059e+37
      %v1536 = vand.u32 %v1265, 2147483648
      %v1537 = vor.u32 1.1754944e-38, %v1536
      %v1538 = vsel %vm1535, %v1537, %v1533
      %v1539 = vmul.f32 1.0, %v1538
      %v1540 = vrcp.pop %v1266
      %v1541 = vmul.f32 %v1266, %v1540
      %v1542 = vsub.f32 1.0, %v1541
      %v1543 = vmul.f32 %v1540, %v1542
      %v1544 = vadd.f32 %v1540, %v1543
      %vm1545 = vweird.f32 %v1266
      %vm1546 = vweird.f32 %v1540
      %vm1547 = vmor %vm1545, %vm1546
      %v1548 = vsel %vm1547, %v1540, %v1544
      %v1549 = vand.u32 2147483647, %v1266
      %vm1550 = vcmp.eq.f32.partialorder %v1549, 8.507059e+37
      %v1551 = vand.u32 %v1266, 2147483648
      %v1552 = vor.u32 1.1754944e-38, %v1551
      %v1553 = vsel %vm1550, %v1552, %v1548
      %v1554 = vmul.f32 1.0, %v1553
      %v1555 = vrcp.pop %v1267
      %v1556 = vmul.f32 %v1267, %v1555
      %v1557 = vsub.f32 1.0, %v1556
      %v1558 = vmul.f32 %v1555, %v1557
      %v1559 = vadd.f32 %v1555, %v1558
      %vm1560 = vweird.f32 %v1267
      %vm1561 = vweird.f32 %v1555
      %vm1562 = vmor %vm1560, %vm1561
      %v1563 = vsel %vm1562, %v1555, %v1559
      %v1564 = vand.u32 2147483647, %v1267
      %vm1565 = vcmp.eq.f32.partialorder %v1564, 8.507059e+37
      %v1566 = vand.u32 %v1267, 2147483648
      %v1567 = vor.u32 1.1754944e-38, %v1566
      %v1568 = vsel %vm1565, %v1567, %v1563
      %v1569 = vmul.f32 1.0, %v1568
      %v1570 = vrcp.pop %v1268
      %v1571 = vmul.f32 %v1268, %v1570
      %v1572 = vsub.f32 1.0, %v1571
      %v1573 = vmul.f32 %v1570, %v1572
      %v1574 = vadd.f32 %v1570, %v1573
      %vm1575 = vweird.f32 %v1268
      %vm1576 = vweird.f32 %v1570
      %vm1577 = vmor %vm1575, %vm1576
      %v1578 = vsel %vm1577, %v1570, %v1574
      %v1579 = vand.u32 2147483647, %v1268
      %vm1580 = vcmp.eq.f32.partialorder %v1579, 8.507059e+37
      %v1581 = vand.u32 %v1268, 2147483648
      %v1582 = vor.u32 1.1754944e-38, %v1581
      %v1583 = vsel %vm1580, %v1582, %v1578
      %v1584 = vmul.f32 1.0, %v1583
      %v1585 = vrcp.pop %v1269
      %v1586 = vmul.f32 %v1269, %v1585
      %v1587 = vsub.f32 1.0, %v1586
      %v1588 = vmul.f32 %v1585, %v1587
      %v1589 = vadd.f32 %v1585, %v1588
      %vm1590 = vweird.f32 %v1269
      %vm1591 = vweird.f32 %v1585
      %vm1592 = vmor %vm1590, %vm1591
      %v1593 = vsel %vm1592, %v1585, %v1589
      %v1594 = vand.u32 2147483647, %v1269
      %vm1595 = vcmp.eq.f32.partialorder %v1594, 8.507059e+37
      %v1596 = vand.u32 %v1269, 2147483648
      %v1597 = vor.u32 1.1754944e-38, %v1596
      %v1598 = vsel %vm1595, %v1597, %v1593
      %v1599 = vmul.f32 1.0, %v1598
      %v1600 = vrcp.pop %v1270
      %v1601 = vmul.f32 %v1270, %v1600
      %v1602 = vsub.f32 1.0, %v1601
      %v1603 = vmul.f32 %v1600, %v1602
      %v1604 = vadd.f32 %v1600, %v1603
      %vm1605 = vweird.f32 %v1270
      %vm1606 = vweird.f32 %v1600
      %vm1607 = vmor %vm1605, %vm1606
      %v1608 = vsel %vm1607, %v1600, %v1604
      %v1609 = vand.u32 2147483647, %v1270
      %vm1610 = vcmp.eq.f32.partialorder %v1609, 8.507059e+37
      %v1611 = vand.u32 %v1270, 2147483648
      %v1612 = vor.u32 1.1754944e-38, %v1611
      %v1613 = vsel %vm1610, %v1612, %v1608
      %v1614 = vmul.f32 1.0, %v1613
      %v1615 = vrcp.pop %v1271
      %v1616 = vmul.f32 %v1271, %v1615
      %v1617 = vsub.f32 1.0, %v1616
      %v1618 = vmul.f32 %v1615, %v1617
      %v1619 = vadd.f32 %v1615, %v1618
      %vm1620 = vweird.f32 %v1271
      %vm1621 = vweird.f32 %v1615
      %vm1622 = vmor %vm1620, %vm1621
      %v1623 = vsel %vm1622, %v1615, %v1619
      %v1624 = vand.u32 2147483647, %v1271
      %vm1625 = vcmp.eq.f32.partialorder %v1624, 8.507059e+37
      %v1626 = vand.u32 %v1271, 2147483648
      %v1627 = vor.u32 1.1754944e-38, %v1626
      %v1628 = vsel %vm1625, %v1627, %v1623
      %v1629 = vmul.f32 1.0, %v1628
      %v1630 = vrcp.pop %v1272
      %v1631 = vmul.f32 %v1272, %v1630
      %v1632 = vsub.f32 1.0, %v1631
      %v1633 = vmul.f32 %v1630, %v1632
      %v1634 = vadd.f32 %v1630, %v1633
      %vm1635 = vweird.f32 %v1272
      %vm1636 = vweird.f32 %v1630
      %vm1637 = vmor %vm1635, %vm1636
      %v1638 = vsel %vm1637, %v1630, %v1634
      %v1639 = vand.u32 2147483647, %v1272
      %vm1640 = vcmp.eq.f32.partialorder %v1639, 8.507059e+37
      %v1641 = vand.u32 %v1272, 2147483648
      %v1642 = vor.u32 1.1754944e-38, %v1641
      %v1643 = vsel %vm1640, %v1642, %v1638
      %v1644 = vmul.f32 1.0, %v1643
      %v1645 = vrcp.pop %v1273
      %v1646 = vmul.f32 %v1273, %v1645
      %v1647 = vsub.f32 1.0, %v1646
      %v1648 = vmul.f32 %v1645, %v1647
      %v1649 = vadd.f32 %v1645, %v1648
      %vm1650 = vweird.f32 %v1273
      %vm1651 = vweird.f32 %v1645
      %vm1652 = vmor %vm1650, %vm1651
      %v1653 = vsel %vm1652, %v1645, %v1649
      %v1654 = vand.u32 2147483647, %v1273
      %vm1655 = vcmp.eq.f32.partialorder %v1654, 8.507059e+37
      %v1656 = vand.u32 %v1273, 2147483648
      %v1657 = vor.u32 1.1754944e-38, %v1656
      %v1658 = vsel %vm1655, %v1657, %v1653
      %v1659 = vmul.f32 1.0, %v1658
      %v1660 = vrcp.pop %v1274
      %v1661 = vmul.f32 %v1274, %v1660
      %v1662 = vsub.f32 1.0, %v1661
      %v1663 = vmul.f32 %v1660, %v1662
      %v1664 = vadd.f32 %v1660, %v1663
      %vm1665 = vweird.f32 %v1274
      %vm1666 = vweird.f32 %v1660
      %vm1667 = vmor %vm1665, %vm1666
      %v1668 = vsel %vm1667, %v1660, %v1664
      %v1669 = vand.u32 2147483647, %v1274
      %vm1670 = vcmp.eq.f32.partialorder %v1669, 8.507059e+37
      %v1671 = vand.u32 %v1274, 2147483648
      %v1672 = vor.u32 1.1754944e-38, %v1671
      %v1673 = vsel %vm1670, %v1672, %v1668
      %v1674 = vmul.f32 1.0, %v1673
      %v1675 = vrcp.pop %v1275
      %v1676 = vmul.f32 %v1275, %v1675
      %v1677 = vsub.f32 1.0, %v1676
      %v1678 = vmul.f32 %v1675, %v1677
      %v1679 = vadd.f32 %v1675, %v1678
      %vm1680 = vweird.f32 %v1275
      %vm1681 = vweird.f32 %v1675
      %vm1682 = vmor %vm1680, %vm1681
      %v1683 = vsel %vm1682, %v1675, %v1679
      %v1684 = vand.u32 2147483647, %v1275
      %vm1685 = vcmp.eq.f32.partialorder %v1684, 8.507059e+37
      %v1686 = vand.u32 %v1275, 2147483648
      %v1687 = vor.u32 1.1754944e-38, %v1686
      %v1688 = vsel %vm1685, %v1687, %v1683
      %v1689 = vmul.f32 1.0, %v1688
      %v1690 = vrcp.pop %v1276
      %v1691 = vmul.f32 %v1276, %v1690
      %v1692 = vsub.f32 1.0, %v1691
      %v1693 = vmul.f32 %v1690, %v1692
      %v1694 = vadd.f32 %v1690, %v1693
      %vm1695 = vweird.f32 %v1276
      %vm1696 = vweird.f32 %v1690
      %vm1697 = vmor %vm1695, %vm1696
      %v1698 = vsel %vm1697, %v1690, %v1694
      %v1699 = vand.u32 2147483647, %v1276
      %vm1700 = vcmp.eq.f32.partialorder %v1699, 8.507059e+37
      %v1701 = vand.u32 %v1276, 2147483648
      %v1702 = vor.u32 1.1754944e-38, %v1701
      %v1703 = vsel %vm1700, %v1702, %v1698
      %v1704 = vmul.f32 1.0, %v1703
      %v1705 = vrcp.pop %v1277
      %v1706 = vmul.f32 %v1277, %v1705
      %v1707 = vsub.f32 1.0, %v1706
      %v1708 = vmul.f32 %v1705, %v1707
      %v1709 = vadd.f32 %v1705, %v1708
      %vm1710 = vweird.f32 %v1277
      %vm1711 = vweird.f32 %v1705
      %vm1712 = vmor %vm1710, %vm1711
      %v1713 = vsel %vm1712, %v1705, %v1709
      %v1714 = vand.u32 2147483647, %v1277
      %vm1715 = vcmp.eq.f32.partialorder %v1714, 8.507059e+37
      %v1716 = vand.u32 %v1277, 2147483648
      %v1717 = vor.u32 1.1754944e-38, %v1716
      %v1718 = vsel %vm1715, %v1717, %v1713
      %v1719 = vmul.f32 1.0, %v1718
      %v1720 = vrcp.pop %v1278
      %v1721 = vmul.f32 %v1278, %v1720
      %v1722 = vsub.f32 1.0, %v1721
      %v1723 = vmul.f32 %v1720, %v1722
      %v1724 = vadd.f32 %v1720, %v1723
      %vm1725 = vweird.f32 %v1278
      %vm1726 = vweird.f32 %v1720
      %vm1727 = vmor %vm1725, %vm1726
      %v1728 = vsel %vm1727, %v1720, %v1724
      %v1729 = vand.u32 2147483647, %v1278
      %vm1730 = vcmp.eq.f32.partialorder %v1729, 8.507059e+37
      %v1731 = vand.u32 %v1278, 2147483648
      %v1732 = vor.u32 1.1754944e-38, %v1731
      %v1733 = vsel %vm1730, %v1732, %v1728
      %v1734 = vmul.f32 1.0, %v1733
      %v1735 = vrcp.pop %v1279
      %v1736 = vmul.f32 %v1279, %v1735
      %v1737 = vsub.f32 1.0, %v1736
      %v1738 = vmul.f32 %v1735, %v1737
      %v1739 = vadd.f32 %v1735, %v1738
      %vm1740 = vweird.f32 %v1279
      %vm1741 = vweird.f32 %v1735
      %vm1742 = vmor %vm1740, %vm1741
      %v1743 = vsel %vm1742, %v1735, %v1739
      %v1744 = vand.u32 2147483647, %v1279
      %vm1745 = vcmp.eq.f32.partialorder %v1744, 8.507059e+37
      %v1746 = vand.u32 %v1279, 2147483648
      %v1747 = vor.u32 1.1754944e-38, %v1746
      %v1748 = vsel %vm1745, %v1747, %v1743
      %v1749 = vmul.f32 1.0, %v1748
      %v1750 = vrcp.pop %v1280
      %v1751 = vmul.f32 %v1280, %v1750
      %v1752 = vsub.f32 1.0, %v1751
      %v1753 = vmul.f32 %v1750, %v1752
      %v1754 = vadd.f32 %v1750, %v1753
      %vm1755 = vweird.f32 %v1280
      %vm1756 = vweird.f32 %v1750
      %vm1757 = vmor %vm1755, %vm1756
      %v1758 = vsel %vm1757, %v1750, %v1754
      %v1759 = vand.u32 2147483647, %v1280
      %vm1760 = vcmp.eq.f32.partialorder %v1759, 8.507059e+37
      %v1761 = vand.u32 %v1280, 2147483648
      %v1762 = vor.u32 1.1754944e-38, %v1761
      %v1763 = vsel %vm1760, %v1762, %v1758
      %v1764 = vmul.f32 1.0, %v1763
      %v1765 = vrcp.pop %v1281
      %v1766 = vmul.f32 %v1281, %v1765
      %v1767 = vsub.f32 1.0, %v1766
      %v1768 = vmul.f32 %v1765, %v1767
      %v1769 = vadd.f32 %v1765, %v1768
      %vm1770 = vweird.f32 %v1281
      %vm1771 = vweird.f32 %v1765
      %vm1772 = vmor %vm1770, %vm1771
      %v1773 = vsel %vm1772, %v1765, %v1769
      %v1774 = vand.u32 2147483647, %v1281
      %vm1775 = vcmp.eq.f32.partialorder %v1774, 8.507059e+37
      %v1776 = vand.u32 %v1281, 2147483648
      %v1777 = vor.u32 1.1754944e-38, %v1776
      %v1778 = vsel %vm1775, %v1777, %v1773
      %v1779 = vmul.f32 1.0, %v1778
      %v1780 = vrcp.pop %v1282
      %v1781 = vmul.f32 %v1282, %v1780
      %v1782 = vsub.f32 1.0, %v1781
      %v1783 = vmul.f32 %v1780, %v1782
      %v1784 = vadd.f32 %v1780, %v1783
      %vm1785 = vweird.f32 %v1282
      %vm1786 = vweird.f32 %v1780
      %vm1787 = vmor %vm1785, %vm1786
      %v1788 = vsel %vm1787, %v1780, %v1784
      %v1789 = vand.u32 2147483647, %v1282
      %vm1790 = vcmp.eq.f32.partialorder %v1789, 8.507059e+37
      %v1791 = vand.u32 %v1282, 2147483648
      %v1792 = vor.u32 1.1754944e-38, %v1791
      %v1793 = vsel %vm1790, %v1792, %v1788
      %v1794 = vmul.f32 1.0, %v1793
      %v1795 = vrcp.pop %v1283
      %v1796 = vmul.f32 %v1283, %v1795
      %v1797 = vsub.f32 1.0, %v1796
      %v1798 = vmul.f32 %v1795, %v1797
      %v1799 = vadd.f32 %v1795, %v1798
      %vm1800 = vweird.f32 %v1283
      %vm1801 = vweird.f32 %v1795
      %vm1802 = vmor %vm1800, %vm1801
      %v1803 = vsel %vm1802, %v1795, %v1799
      %v1804 = vand.u32 2147483647, %v1283
      %vm1805 = vcmp.eq.f32.partialorder %v1804, 8.507059e+37
      %v1806 = vand.u32 %v1283, 2147483648
      %v1807 = vor.u32 1.1754944e-38, %v1806
      %v1808 = vsel %vm1805, %v1807, %v1803
      %v1809 = vmul.f32 1.0, %v1808
      %v1810 = vrcp.pop %v1284
      %v1811 = vmul.f32 %v1284, %v1810
      %v1812 = vsub.f32 1.0, %v1811
      %v1813 = vmul.f32 %v1810, %v1812
      %v1814 = vadd.f32 %v1810, %v1813
      %vm1815 = vweird.f32 %v1284
      %vm1816 = vweird.f32 %v1810
      %vm1817 = vmor %vm1815, %vm1816
      %v1818 = vsel %vm1817, %v1810, %v1814
      %v1819 = vand.u32 2147483647, %v1284
      %vm1820 = vcmp.eq.f32.partialorder %v1819, 8.507059e+37
      %v1821 = vand.u32 %v1284, 2147483648
      %v1822 = vor.u32 1.1754944e-38, %v1821
      %v1823 = vsel %vm1820, %v1822, %v1818
      %v1824 = vmul.f32 1.0, %v1823
      %v1825 = vrcp.pop %v1285
      %v1826 = vmul.f32 %v1285, %v1825
      %v1827 = vsub.f32 1.0, %v1826
      %v1828 = vmul.f32 %v1825, %v1827
      %v1829 = vadd.f32 %v1825, %v1828
      %vm1830 = vweird.f32 %v1285
      %vm1831 = vweird.f32 %v1825
      %vm1832 = vmor %vm1830, %vm1831
      %v1833 = vsel %vm1832, %v1825, %v1829
      %v1834 = vand.u32 2147483647, %v1285
      %vm1835 = vcmp.eq.f32.partialorder %v1834, 8.507059e+37
      %v1836 = vand.u32 %v1285, 2147483648
      %v1837 = vor.u32 1.1754944e-38, %v1836
      %v1838 = vsel %vm1835, %v1837, %v1833
      %v1839 = vmul.f32 1.0, %v1838
      %v1840 = vrcp.pop %v1286
      %v1841 = vmul.f32 %v1286, %v1840
      %v1842 = vsub.f32 1.0, %v1841
      %v1843 = vmul.f32 %v1840, %v1842
      %v1844 = vadd.f32 %v1840, %v1843
      %vm1845 = vweird.f32 %v1286
      %vm1846 = vweird.f32 %v1840
      %vm1847 = vmor %vm1845, %vm1846
      %v1848 = vsel %vm1847, %v1840, %v1844
      %v1849 = vand.u32 2147483647, %v1286
      %vm1850 = vcmp.eq.f32.partialorder %v1849, 8.507059e+37
      %v1851 = vand.u32 %v1286, 2147483648
      %v1852 = vor.u32 1.1754944e-38, %v1851
      %v1853 = vsel %vm1850, %v1852, %v1848
      %v1854 = vmul.f32 1.0, %v1853
      %v1855 = vrcp.pop %v1287
      %v1856 = vmul.f32 %v1287, %v1855
      %v1857 = vsub.f32 1.0, %v1856
      %v1858 = vmul.f32 %v1855, %v1857
      %v1859 = vadd.f32 %v1855, %v1858
      %vm1860 = vweird.f32 %v1287
      %vm1861 = vweird.f32 %v1855
      %vm1862 = vmor %vm1860, %vm1861
      %v1863 = vsel %vm1862, %v1855, %v1859
      %v1864 = vand.u32 2147483647, %v1287
      %vm1865 = vcmp.eq.f32.partialorder %v1864, 8.507059e+37
      %v1866 = vand.u32 %v1287, 2147483648
      %v1867 = vor.u32 1.1754944e-38, %v1866
      %v1868 = vsel %vm1865, %v1867, %v1863
      %v1869 = vmul.f32 1.0, %v1868
      %v1870 = vrcp.pop %v1288
      %v1871 = vmul.f32 %v1288, %v1870
      %v1872 = vsub.f32 1.0, %v1871
      %v1873 = vmul.f32 %v1870, %v1872
      %v1874 = vadd.f32 %v1870, %v1873
      %vm1875 = vweird.f32 %v1288
      %vm1876 = vweird.f32 %v1870
      %vm1877 = vmor %vm1875, %vm1876
      %v1878 = vsel %vm1877, %v1870, %v1874
      %v1879 = vand.u32 2147483647, %v1288
      %vm1880 = vcmp.eq.f32.partialorder %v1879, 8.507059e+37
      %v1881 = vand.u32 %v1288, 2147483648
      %v1882 = vor.u32 1.1754944e-38, %v1881
      %v1883 = vsel %vm1880, %v1882, %v1878
      %v1884 = vmul.f32 1.0, %v1883
      %v1885 = vrcp.pop %v1289
      %v1886 = vmul.f32 %v1289, %v1885
      %v1887 = vsub.f32 1.0, %v1886
      %v1888 = vmul.f32 %v1885, %v1887
      %v1889 = vadd.f32 %v1885, %v1888
      %vm1890 = vweird.f32 %v1289
      %vm1891 = vweird.f32 %v1885
      %vm1892 = vmor %vm1890, %vm1891
      %v1893 = vsel %vm1892, %v1885, %v1889
      %v1894 = vand.u32 2147483647, %v1289
      %vm1895 = vcmp.eq.f32.partialorder %v1894, 8.507059e+37
      %v1896 = vand.u32 %v1289, 2147483648
      %v1897 = vor.u32 1.1754944e-38, %v1896
      %v1898 = vsel %vm1895, %v1897, %v1893
      %v1899 = vmul.f32 1.0, %v1898
      %v1900 = vrcp.pop %v1290
      %v1901 = vmul.f32 %v1290, %v1900
      %v1902 = vsub.f32 1.0, %v1901
      %v1903 = vmul.f32 %v1900, %v1902
      %v1904 = vadd.f32 %v1900, %v1903
      %vm1905 = vweird.f32 %v1290
      %vm1906 = vweird.f32 %v1900
      %vm1907 = vmor %vm1905, %vm1906
      %v1908 = vsel %vm1907, %v1900, %v1904
      %v1909 = vand.u32 2147483647, %v1290
      %vm1910 = vcmp.eq.f32.partialorder %v1909, 8.507059e+37
      %v1911 = vand.u32 %v1290, 2147483648
      %v1912 = vor.u32 1.1754944e-38, %v1911
      %v1913 = vsel %vm1910, %v1912, %v1908
      %v1914 = vmul.f32 1.0, %v1913
      %v1915 = vrcp.pop %v1291
      %v1916 = vmul.f32 %v1291, %v1915
      %v1917 = vsub.f32 1.0, %v1916
      %v1918 = vmul.f32 %v1915, %v1917
      %v1919 = vadd.f32 %v1915, %v1918
      %vm1920 = vweird.f32 %v1291
      %vm1921 = vweird.f32 %v1915
      %vm1922 = vmor %vm1920, %vm1921
      %v1923 = vsel %vm1922, %v1915, %v1919
      %v1924 = vand.u32 2147483647, %v1291
      %vm1925 = vcmp.eq.f32.partialorder %v1924, 8.507059e+37
      %v1926 = vand.u32 %v1291, 2147483648
      %v1927 = vor.u32 1.1754944e-38, %v1926
      %v1928 = vsel %vm1925, %v1927, %v1923
      %v1929 = vmul.f32 1.0, %v1928
      %v1930 = vrcp.pop %v1292
      %v1931 = vmul.f32 %v1292, %v1930
      %v1932 = vsub.f32 1.0, %v1931
      %v1933 = vmul.f32 %v1930, %v1932
      %v1934 = vadd.f32 %v1930, %v1933
      %vm1935 = vweird.f32 %v1292
      %vm1936 = vweird.f32 %v1930
      %vm1937 = vmor %vm1935, %vm1936
      %v1938 = vsel %vm1937, %v1930, %v1934
      %v1939 = vand.u32 2147483647, %v1292
      %vm1940 = vcmp.eq.f32.partialorder %v1939, 8.507059e+37
      %v1941 = vand.u32 %v1292, 2147483648
      %v1942 = vor.u32 1.1754944e-38, %v1941
      %v1943 = vsel %vm1940, %v1942, %v1938
      %v1944 = vmul.f32 1.0, %v1943
      %v1945 = vrcp.pop %v1293
      %v1946 = vmul.f32 %v1293, %v1945
      %v1947 = vsub.f32 1.0, %v1946
      %v1948 = vmul.f32 %v1945, %v1947
      %v1949 = vadd.f32 %v1945, %v1948
      %vm1950 = vweird.f32 %v1293
      %vm1951 = vweird.f32 %v1945
      %vm1952 = vmor %vm1950, %vm1951
      %v1953 = vsel %vm1952, %v1945, %v1949
      %v1954 = vand.u32 2147483647, %v1293
      %vm1955 = vcmp.eq.f32.partialorder %v1954, 8.507059e+37
      %v1956 = vand.u32 %v1293, 2147483648
      %v1957 = vor.u32 1.1754944e-38, %v1956
      %v1958 = vsel %vm1955, %v1957, %v1953
      %v1959 = vmul.f32 1.0, %v1958
      %v1960 = vrcp.pop %v1294
      %v1961 = vmul.f32 %v1294, %v1960
      %v1962 = vsub.f32 1.0, %v1961
      %v1963 = vmul.f32 %v1960, %v1962
      %v1964 = vadd.f32 %v1960, %v1963
      %vm1965 = vweird.f32 %v1294
      %vm1966 = vweird.f32 %v1960
      %vm1967 = vmor %vm1965, %vm1966
      %v1968 = vsel %vm1967, %v1960, %v1964
      %v1969 = vand.u32 2147483647, %v1294
      %vm1970 = vcmp.eq.f32.partialorder %v1969, 8.507059e+37
      %v1971 = vand.u32 %v1294, 2147483648
      %v1972 = vor.u32 1.1754944e-38, %v1971
      %v1973 = vsel %vm1970, %v1972, %v1968
      %v1974 = vmul.f32 1.0, %v1973
      %v1975 = vrcp.pop %v1295
      %v1976 = vmul.f32 %v1295, %v1975
      %v1977 = vsub.f32 1.0, %v1976
      %v1978 = vmul.f32 %v1975, %v1977
      %v1979 = vadd.f32 %v1975, %v1978
      %vm1980 = vweird.f32 %v1295
      %vm1981 = vweird.f32 %v1975
      %vm1982 = vmor %vm1980, %vm1981
      %v1983 = vsel %vm1982, %v1975, %v1979
      %v1984 = vand.u32 2147483647, %v1295
      %vm1985 = vcmp.eq.f32.partialorder %v1984, 8.507059e+37
      %v1986 = vand.u32 %v1295, 2147483648
      %v1987 = vor.u32 1.1754944e-38, %v1986
      %v1988 = vsel %vm1985, %v1987, %v1983
      %v1989 = vmul.f32 1.0, %v1988
      %v1990 = vrcp.pop %v1296
      %v1991 = vmul.f32 %v1296, %v1990
      %v1992 = vsub.f32 1.0, %v1991
      %v1993 = vmul.f32 %v1990, %v1992
      %v1994 = vadd.f32 %v1990, %v1993
      %vm1995 = vweird.f32 %v1296
      %vm1996 = vweird.f32 %v1990
      %vm1997 = vmor %vm1995, %vm1996
      %v1998 = vsel %vm1997, %v1990, %v1994
      %v1999 = vand.u32 2147483647, %v1296
      %vm2000 = vcmp.eq.f32.partialorder %v1999, 8.507059e+37
      %v2001 = vand.u32 %v1296, 2147483648
      %v2002 = vor.u32 1.1754944e-38, %v2001
      %v2003 = vsel %vm2000, %v2002, %v1998
      %v2004 = vmul.f32 1.0, %v2003
      %v2005 = vrcp.pop %v1297
      %v2006 = vmul.f32 %v1297, %v2005
      %v2007 = vsub.f32 1.0, %v2006
      %v2008 = vmul.f32 %v2005, %v2007
      %v2009 = vadd.f32 %v2005, %v2008
      %vm2010 = vweird.f32 %v1297
      %vm2011 = vweird.f32 %v2005
      %vm2012 = vmor %vm2010, %vm2011
      %v2013 = vsel %vm2012, %v2005, %v2009
      %v2014 = vand.u32 2147483647, %v1297
      %vm2015 = vcmp.eq.f32.partialorder %v2014, 8.507059e+37
      %v2016 = vand.u32 %v1297, 2147483648
      %v2017 = vor.u32 1.1754944e-38, %v2016
      %v2018 = vsel %vm2015, %v2017, %v2013
      %v2019 = vmul.f32 1.0, %v2018
      %v2020 = vrcp.pop %v1298
      %v2021 = vmul.f32 %v1298, %v2020
      %v2022 = vsub.f32 1.0, %v2021
      %v2023 = vmul.f32 %v2020, %v2022
      %v2024 = vadd.f32 %v2020, %v2023
      %vm2025 = vweird.f32 %v1298
      %vm2026 = vweird.f32 %v2020
      %vm2027 = vmor %vm2025, %vm2026
      %v2028 = vsel %vm2027, %v2020, %v2024
      %v2029 = vand.u32 2147483647, %v1298
      %vm2030 = vcmp.eq.f32.partialorder %v2029, 8.507059e+37
      %v2031 = vand.u32 %v1298, 2147483648
      %v2032 = vor.u32 1.1754944e-38, %v2031
      %v2033 = vsel %vm2030, %v2032, %v2028
      %v2034 = vmul.f32 1.0, %v2033
      %v2035 = vrcp.pop %v1299
      %v2036 = vmul.f32 %v1299, %v2035
      %v2037 = vsub.f32 1.0, %v2036
      %v2038 = vmul.f32 %v2035, %v2037
      %v2039 = vadd.f32 %v2035, %v2038
      %vm2040 = vweird.f32 %v1299
      %vm2041 = vweird.f32 %v2035
      %vm2042 = vmor %vm2040, %vm2041
      %v2043 = vsel %vm2042, %v2035, %v2039
      %v2044 = vand.u32 2147483647, %v1299
      %vm2045 = vcmp.eq.f32.partialorder %v2044, 8.507059e+37
      %v2046 = vand.u32 %v1299, 2147483648
      %v2047 = vor.u32 1.1754944e-38, %v2046
      %v2048 = vsel %vm2045, %v2047, %v2043
      %v2049 = vmul.f32 1.0, %v2048
      %v2050 = vrcp.pop %v1300
      %v2051 = vmul.f32 %v1300, %v2050
      %v2052 = vsub.f32 1.0, %v2051
      %v2053 = vmul.f32 %v2050, %v2052
      %v2054 = vadd.f32 %v2050, %v2053
      %vm2055 = vweird.f32 %v1300
      %vm2056 = vweird.f32 %v2050
      %vm2057 = vmor %vm2055, %vm2056
      %v2058 = vsel %vm2057, %v2050, %v2054
      %v2059 = vand.u32 2147483647, %v1300
      %vm2060 = vcmp.eq.f32.partialorder %v2059, 8.507059e+37
      %v2061 = vand.u32 %v1300, 2147483648
      %v2062 = vor.u32 1.1754944e-38, %v2061
      %v2063 = vsel %vm2060, %v2062, %v2058
      %v2064 = vmul.f32 1.0, %v2063
      %v2065 = vrcp.pop %v1301
      %v2066 = vmul.f32 %v1301, %v2065
      %v2067 = vsub.f32 1.0, %v2066
      %v2068 = vmul.f32 %v2065, %v2067
      %v2069 = vadd.f32 %v2065, %v2068
      %vm2070 = vweird.f32 %v1301
      %vm2071 = vweird.f32 %v2065
      %vm2072 = vmor %vm2070, %vm2071
      %v2073 = vsel %vm2072, %v2065, %v2069
      %v2074 = vand.u32 2147483647, %v1301
      %vm2075 = vcmp.eq.f32.partialorder %v2074, 8.507059e+37
      %v2076 = vand.u32 %v1301, 2147483648
      %v2077 = vor.u32 1.1754944e-38, %v2076
      %v2078 = vsel %vm2075, %v2077, %v2073
      %v2079 = vmul.f32 1.0, %v2078
      %v2080 = vrcp.pop %v1302
      %v2081 = vmul.f32 %v1302, %v2080
      %v2082 = vsub.f32 1.0, %v2081
      %v2083 = vmul.f32 %v2080, %v2082
      %v2084 = vadd.f32 %v2080, %v2083
      %vm2085 = vweird.f32 %v1302
      %vm2086 = vweird.f32 %v2080
      %vm2087 = vmor %vm2085, %vm2086
      %v2088 = vsel %vm2087, %v2080, %v2084
      %v2089 = vand.u32 2147483647, %v1302
      %vm2090 = vcmp.eq.f32.partialorder %v2089, 8.507059e+37
      %v2091 = vand.u32 %v1302, 2147483648
      %v2092 = vor.u32 1.1754944e-38, %v2091
      %v2093 = vsel %vm2090, %v2092, %v2088
      %v2094 = vmul.f32 1.0, %v2093
      %v2095 = vrcp.pop %v1303
      %v2096 = vmul.f32 %v1303, %v2095
      %v2097 = vsub.f32 1.0, %v2096
      %v2098 = vmul.f32 %v2095, %v2097
      %v2099 = vadd.f32 %v2095, %v2098
      %vm2100 = vweird.f32 %v1303
      %vm2101 = vweird.f32 %v2095
      %vm2102 = vmor %vm2100, %vm2101
      %v2103 = vsel %vm2102, %v2095, %v2099
      %v2104 = vand.u32 2147483647, %v1303
      %vm2105 = vcmp.eq.f32.partialorder %v2104, 8.507059e+37
      %v2106 = vand.u32 %v1303, 2147483648
      %v2107 = vor.u32 1.1754944e-38, %v2106
      %v2108 = vsel %vm2105, %v2107, %v2103
      %v2109 = vmul.f32 1.0, %v2108
      %v2110 = vrcp.pop %v1304
      %v2111 = vmul.f32 %v1304, %v2110
      %v2112 = vsub.f32 1.0, %v2111
      %v2113 = vmul.f32 %v2110, %v2112
      %v2114 = vadd.f32 %v2110, %v2113
      %vm2115 = vweird.f32 %v1304
      %vm2116 = vweird.f32 %v2110
      %vm2117 = vmor %vm2115, %vm2116
      %v2118 = vsel %vm2117, %v2110, %v2114
      %v2119 = vand.u32 2147483647, %v1304
      %vm2120 = vcmp.eq.f32.partialorder %v2119, 8.507059e+37
      %v2121 = vand.u32 %v1304, 2147483648
      %v2122 = vor.u32 1.1754944e-38, %v2121
      %v2123 = vsel %vm2120, %v2122, %v2118
      %v2124 = vmul.f32 1.0, %v2123
      %v2125 = vrcp.pop %v1305
      %v2126 = vmul.f32 %v1305, %v2125
      %v2127 = vsub.f32 1.0, %v2126
      %v2128 = vmul.f32 %v2125, %v2127
      %v2129 = vadd.f32 %v2125, %v2128
      %vm2130 = vweird.f32 %v1305
      %vm2131 = vweird.f32 %v2125
      %vm2132 = vmor %vm2130, %vm2131
      %v2133 = vsel %vm2132, %v2125, %v2129
      %v2134 = vand.u32 2147483647, %v1305
      %vm2135 = vcmp.eq.f32.partialorder %v2134, 8.507059e+37
      %v2136 = vand.u32 %v1305, 2147483648
      %v2137 = vor.u32 1.1754944e-38, %v2136
      %v2138 = vsel %vm2135, %v2137, %v2133
      %v2139 = vmul.f32 1.0, %v2138
      %v2140 = vrcp.pop %v1306
      %v2141 = vmul.f32 %v1306, %v2140
      %v2142 = vsub.f32 1.0, %v2141
      %v2143 = vmul.f32 %v2140, %v2142
      %v2144 = vadd.f32 %v2140, %v2143
      %vm2145 = vweird.f32 %v1306
      %vm2146 = vweird.f32 %v2140
      %vm2147 = vmor %vm2145, %vm2146
      %v2148 = vsel %vm2147, %v2140, %v2144
      %v2149 = vand.u32 2147483647, %v1306
      %vm2150 = vcmp.eq.f32.partialorder %v2149, 8.507059e+37
      %v2151 = vand.u32 %v1306, 2147483648
      %v2152 = vor.u32 1.1754944e-38, %v2151
      %v2153 = vsel %vm2150, %v2152, %v2148
      %v2154 = vmul.f32 1.0, %v2153
      %v2155 = vrcp.pop %v1307
      %v2156 = vmul.f32 %v1307, %v2155
      %v2157 = vsub.f32 1.0, %v2156
      %v2158 = vmul.f32 %v2155, %v2157
      %v2159 = vadd.f32 %v2155, %v2158
      %vm2160 = vweird.f32 %v1307
      %vm2161 = vweird.f32 %v2155
      %vm2162 = vmor %vm2160, %vm2161
      %v2163 = vsel %vm2162, %v2155, %v2159
      %v2164 = vand.u32 2147483647, %v1307
      %vm2165 = vcmp.eq.f32.partialorder %v2164, 8.507059e+37
      %v2166 = vand.u32 %v1307, 2147483648
      %v2167 = vor.u32 1.1754944e-38, %v2166
      %v2168 = vsel %vm2165, %v2167, %v2163
      %v2169 = vmul.f32 1.0, %v2168
      %v2170 = vrcp.pop %v1308
      %v2171 = vmul.f32 %v1308, %v2170
      %v2172 = vsub.f32 1.0, %v2171
      %v2173 = vmul.f32 %v2170, %v2172
      %v2174 = vadd.f32 %v2170, %v2173
      %vm2175 = vweird.f32 %v1308
      %vm2176 = vweird.f32 %v2170
      %vm2177 = vmor %vm2175, %vm2176
      %v2178 = vsel %vm2177, %v2170, %v2174
      %v2179 = vand.u32 2147483647, %v1308
      %vm2180 = vcmp.eq.f32.partialorder %v2179, 8.507059e+37
      %v2181 = vand.u32 %v1308, 2147483648
      %v2182 = vor.u32 1.1754944e-38, %v2181
      %v2183 = vsel %vm2180, %v2182, %v2178
      %v2184 = vmul.f32 1.0, %v2183
      %v2185 = vrcp.pop %v1309
      %v2186 = vmul.f32 %v1309, %v2185
      %v2187 = vsub.f32 1.0, %v2186
      %v2188 = vmul.f32 %v2185, %v2187
      %v2189 = vadd.f32 %v2185, %v2188
      %vm2190 = vweird.f32 %v1309
      %vm2191 = vweird.f32 %v2185
      %vm2192 = vmor %vm2190, %vm2191
      %v2193 = vsel %vm2192, %v2185, %v2189
      %v2194 = vand.u32 2147483647, %v1309
      %vm2195 = vcmp.eq.f32.partialorder %v2194, 8.507059e+37
      %v2196 = vand.u32 %v1309, 2147483648
      %v2197 = vor.u32 1.1754944e-38, %v2196
      %v2198 = vsel %vm2195, %v2197, %v2193
      %v2199 = vmul.f32 1.0, %v2198
      %v2200 = vrcp.pop %v1310
      %v2201 = vmul.f32 %v1310, %v2200
      %v2202 = vsub.f32 1.0, %v2201
      %v2203 = vmul.f32 %v2200, %v2202
      %v2204 = vadd.f32 %v2200, %v2203
      %vm2205 = vweird.f32 %v1310
      %vm2206 = vweird.f32 %v2200
      %vm2207 = vmor %vm2205, %vm2206
      %v2208 = vsel %vm2207, %v2200, %v2204
      %v2209 = vand.u32 2147483647, %v1310
      %vm2210 = vcmp.eq.f32.partialorder %v2209, 8.507059e+37
      %v2211 = vand.u32 %v1310, 2147483648
      %v2212 = vor.u32 1.1754944e-38, %v2211
      %v2213 = vsel %vm2210, %v2212, %v2208
      %v2214 = vmul.f32 1.0, %v2213
      %v2215 = vrcp.pop %v1311
      %v2216 = vmul.f32 %v1311, %v2215
      %v2217 = vsub.f32 1.0, %v2216
      %v2218 = vmul.f32 %v2215, %v2217
      %v2219 = vadd.f32 %v2215, %v2218
      %vm2220 = vweird.f32 %v1311
      %vm2221 = vweird.f32 %v2215
      %vm2222 = vmor %vm2220, %vm2221
      %v2223 = vsel %vm2222, %v2215, %v2219
      %v2224 = vand.u32 2147483647, %v1311
      %vm2225 = vcmp.eq.f32.partialorder %v2224, 8.507059e+37
      %v2226 = vand.u32 %v1311, 2147483648
      %v2227 = vor.u32 1.1754944e-38, %v2226
      %v2228 = vsel %vm2225, %v2227, %v2223
      %v2229 = vmul.f32 1.0, %v2228
      %v2230 = vrcp.pop %v1312
      %v2231 = vmul.f32 %v1312, %v2230
      %v2232 = vsub.f32 1.0, %v2231
      %v2233 = vmul.f32 %v2230, %v2232
      %v2234 = vadd.f32 %v2230, %v2233
      %vm2235 = vweird.f32 %v1312
      %vm2236 = vweird.f32 %v2230
      %vm2237 = vmor %vm2235, %vm2236
      %v2238 = vsel %vm2237, %v2230, %v2234
      %v2239 = vand.u32 2147483647, %v1312
      %vm2240 = vcmp.eq.f32.partialorder %v2239, 8.507059e+37
      %v2241 = vand.u32 %v1312, 2147483648
      %v2242 = vor.u32 1.1754944e-38, %v2241
      %v2243 = vsel %vm2240, %v2242, %v2238
      %v2244 = vmul.f32 1.0, %v2243
      %v2245 = vrcp.pop %v1313
      %v2246 = vmul.f32 %v1313, %v2245
      %v2247 = vsub.f32 1.0, %v2246
      %v2248 = vmul.f32 %v2245, %v2247
      %v2249 = vadd.f32 %v2245, %v2248
      %vm2250 = vweird.f32 %v1313
      %vm2251 = vweird.f32 %v2245
      %vm2252 = vmor %vm2250, %vm2251
      %v2253 = vsel %vm2252, %v2245, %v2249
      %v2254 = vand.u32 2147483647, %v1313
      %vm2255 = vcmp.eq.f32.partialorder %v2254, 8.507059e+37
      %v2256 = vand.u32 %v1313, 2147483648
      %v2257 = vor.u32 1.1754944e-38, %v2256
      %v2258 = vsel %vm2255, %v2257, %v2253
      %v2259 = vmul.f32 1.0, %v2258
      %v2260 = vrcp.pop %v1314
      %v2261 = vmul.f32 %v1314, %v2260
      %v2262 = vsub.f32 1.0, %v2261
      %v2263 = vmul.f32 %v2260, %v2262
      %v2264 = vadd.f32 %v2260, %v2263
      %vm2265 = vweird.f32 %v1314
      %vm2266 = vweird.f32 %v2260
      %vm2267 = vmor %vm2265, %vm2266
      %v2268 = vsel %vm2267, %v2260, %v2264
      %v2269 = vand.u32 2147483647, %v1314
      %vm2270 = vcmp.eq.f32.partialorder %v2269, 8.507059e+37
      %v2271 = vand.u32 %v1314, 2147483648
      %v2272 = vor.u32 1.1754944e-38, %v2271
      %v2273 = vsel %vm2270, %v2272, %v2268
      %v2274 = vmul.f32 1.0, %v2273
      %vm2275 = vcmp.ge.f32.partialorder %v804, 0.0
      %vm2276 = vcmp.ge.f32.partialorder %v807, 0.0
      %vm2277 = vcmp.ge.f32.partialorder %v810, 0.0
      %vm2278 = vcmp.ge.f32.partialorder %v813, 0.0
      %vm2279 = vcmp.ge.f32.partialorder %v816, 0.0
      %vm2280 = vcmp.ge.f32.partialorder %v819, 0.0
      %vm2281 = vcmp.ge.f32.partialorder %v822, 0.0
      %vm2282 = vcmp.ge.f32.partialorder %v825, 0.0
      %vm2283 = vcmp.ge.f32.partialorder %v828, 0.0
      %vm2284 = vcmp.ge.f32.partialorder %v831, 0.0
      %vm2285 = vcmp.ge.f32.partialorder %v834, 0.0
      %vm2286 = vcmp.ge.f32.partialorder %v837, 0.0
      %vm2287 = vcmp.ge.f32.partialorder %v840, 0.0
      %vm2288 = vcmp.ge.f32.partialorder %v843, 0.0
      %vm2289 = vcmp.ge.f32.partialorder %v846, 0.0
      %vm2290 = vcmp.ge.f32.partialorder %v849, 0.0
      %vm2291 = vcmp.ge.f32.partialorder %v852, 0.0
      %vm2292 = vcmp.ge.f32.partialorder %v855, 0.0
      %vm2293 = vcmp.ge.f32.partialorder %v858, 0.0
      %vm2294 = vcmp.ge.f32.partialorder %v861, 0.0
      %vm2295 = vcmp.ge.f32.partialorder %v864, 0.0
      %vm2296 = vcmp.ge.f32.partialorder %v867, 0.0
      %vm2297 = vcmp.ge.f32.partialorder %v870, 0.0
      %vm2298 = vcmp.ge.f32.partialorder %v873, 0.0
      %vm2299 = vcmp.ge.f32.partialorder %v876, 0.0
      %vm2300 = vcmp.ge.f32.partialorder %v879, 0.0
      %vm2301 = vcmp.ge.f32.partialorder %v882, 0.0
      %vm2302 = vcmp.ge.f32.partialorder %v885, 0.0
      %vm2303 = vcmp.ge.f32.partialorder %v888, 0.0
      %vm2304 = vcmp.ge.f32.partialorder %v891, 0.0
      %vm2305 = vcmp.ge.f32.partialorder %v894, 0.0
      %vm2306 = vcmp.ge.f32.partialorder %v897, 0.0
      %vm2307 = vcmp.ge.f32.partialorder %v900, 0.0
      %vm2308 = vcmp.ge.f32.partialorder %v903, 0.0
      %vm2309 = vcmp.ge.f32.partialorder %v906, 0.0
      %vm2310 = vcmp.ge.f32.partialorder %v909, 0.0
      %vm2311 = vcmp.ge.f32.partialorder %v912, 0.0
      %vm2312 = vcmp.ge.f32.partialorder %v915, 0.0
      %vm2313 = vcmp.ge.f32.partialorder %v918, 0.0
      %vm2314 = vcmp.ge.f32.partialorder %v921, 0.0
      %vm2315 = vcmp.ge.f32.partialorder %v924, 0.0
      %vm2316 = vcmp.ge.f32.partialorder %v927, 0.0
      %vm2317 = vcmp.ge.f32.partialorder %v930, 0.0
      %vm2318 = vcmp.ge.f32.partialorder %v933, 0.0
      %vm2319 = vcmp.ge.f32.partialorder %v936, 0.0
      %vm2320 = vcmp.ge.f32.partialorder %v939, 0.0
      %vm2321 = vcmp.ge.f32.partialorder %v942, 0.0
      %vm2322 = vcmp.ge.f32.partialorder %v945, 0.0
      %vm2323 = vcmp.ge.f32.partialorder %v948, 0.0
      %vm2324 = vcmp.ge.f32.partialorder %v951, 0.0
      %vm2325 = vcmp.ge.f32.partialorder %v954, 0.0
      %vm2326 = vcmp.ge.f32.partialorder %v957, 0.0
      %vm2327 = vcmp.ge.f32.partialorder %v960, 0.0
      %vm2328 = vcmp.ge.f32.partialorder %v963, 0.0
      %vm2329 = vcmp.ge.f32.partialorder %v966, 0.0
      %vm2330 = vcmp.ge.f32.partialorder %v969, 0.0
      %vm2331 = vcmp.ge.f32.partialorder %v972, 0.0
      %vm2332 = vcmp.ge.f32.partialorder %v975, 0.0
      %vm2333 = vcmp.ge.f32.partialorder %v978, 0.0
      %vm2334 = vcmp.ge.f32.partialorder %v981, 0.0
      %vm2335 = vcmp.ge.f32.partialorder %v984, 0.0
      %vm2336 = vcmp.ge.f32.partialorder %v987, 0.0
      %vm2337 = vcmp.ge.f32.partialorder %v990, 0.0
      %vm2338 = vcmp.ge.f32.partialorder %v993, 0.0
      %v2339 = vmul.f32 %v1124, %v1329
      %v2340 = vmul.f32 %v1126, %v1344
      %v2341 = vmul.f32 %v1128, %v1359
      %v2342 = vmul.f32 %v1130, %v1374
      %v2343 = vmul.f32 %v1132, %v1389
      %v2344 = vmul.f32 %v1134, %v1404
      %v2345 = vmul.f32 %v1136, %v1419
      %v2346 = vmul.f32 %v1138, %v1434
      %v2347 = vmul.f32 %v1140, %v1449
      %v2348 = vmul.f32 %v1142, %v1464
      %v2349 = vmul.f32 %v1144, %v1479
      %v2350 = vmul.f32 %v1146, %v1494
      %v2351 = vmul.f32 %v1148, %v1509
      %v2352 = vmul.f32 %v1150, %v1524
      %v2353 = vmul.f32 %v1152, %v1539
      %v2354 = vmul.f32 %v1154, %v1554
      %v2355 = vmul.f32 %v1156, %v1569
      %v2356 = vmul.f32 %v1158, %v1584
      %v2357 = vmul.f32 %v1160, %v1599
      %v2358 = vmul.f32 %v1162, %v1614
      %v2359 = vmul.f32 %v1164, %v1629
      %v2360 = vmul.f32 %v1166, %v1644
      %v2361 = vmul.f32 %v1168, %v1659
      %v2362 = vmul.f32 %v1170, %v1674
      %v2363 = vmul.f32 %v1172, %v1689
      %v2364 = vmul.f32 %v1174, %v1704
      %v2365 = vmul.f32 %v1176, %v1719
      %v2366 = vmul.f32 %v1178, %v1734
      %v2367 = vmul.f32 %v1180, %v1749
      %v2368 = vmul.f32 %v1182, %v1764
      %v2369 = vmul.f32 %v1184, %v1779
      %v2370 = vmul.f32 %v1186, %v1794
      %v2371 = vmul.f32 %v1188, %v1809
      %v2372 = vmul.f32 %v1190, %v1824
      %v2373 = vmul.f32 %v1192, %v1839
      %v2374 = vmul.f32 %v1194, %v1854
      %v2375 = vmul.f32 %v1196, %v1869
      %v2376 = vmul.f32 %v1198, %v1884
      %v2377 = vmul.f32 %v1200, %v1899
      %v2378 = vmul.f32 %v1202, %v1914
      %v2379 = vmul.f32 %v1204, %v1929
      %v2380 = vmul.f32 %v1206, %v1944
      %v2381 = vmul.f32 %v1208, %v1959
      %v2382 = vmul.f32 %v1210, %v1974
      %v2383 = vmul.f32 %v1212, %v1989
      %v2384 = vmul.f32 %v1214, %v2004
      %v2385 = vmul.f32 %v1216, %v2019
      %v2386 = vmul.f32 %v1218, %v2034
      %v2387 = vmul.f32 %v1220, %v2049
      %v2388 = vmul.f32 %v1222, %v2064
      %v2389 = vmul.f32 %v1224, %v2079
      %v2390 = vmul.f32 %v1226, %v2094
      %v2391 = vmul.f32 %v1228, %v2109
      %v2392 = vmul.f32 %v1230, %v2124
      %v2393 = vmul.f32 %v1232, %v2139
      %v2394 = vmul.f32 %v1234, %v2154
      %v2395 = vmul.f32 %v1236, %v2169
      %v2396 = vmul.f32 %v1238, %v2184
      %v2397 = vmul.f32 %v1240, %v2199
      %v2398 = vmul.f32 %v1242, %v2214
      %v2399 = vmul.f32 %v1244, %v2229
      %v2400 = vmul.f32 %v1246, %v2244
      %v2401 = vmul.f32 %v1248, %v2259
      %v2402 = vmul.f32 %v1250, %v2274
      %v2403 = vsel %vm2275, %v1329, %v2339
      %v2404 = vsel %vm2276, %v1344, %v2340
      %v2405 = vsel %vm2277, %v1359, %v2341
      %v2406 = vsel %vm2278, %v1374, %v2342
      %v2407 = vsel %vm2279, %v1389, %v2343
      %v2408 = vsel %vm2280, %v1404, %v2344
      %v2409 = vsel %vm2281, %v1419, %v2345
      %v2410 = vsel %vm2282, %v1434, %v2346
      %v2411 = vsel %vm2283, %v1449, %v2347
      %v2412 = vsel %vm2284, %v1464, %v2348
      %v2413 = vsel %vm2285, %v1479, %v2349
      %v2414 = vsel %vm2286, %v1494, %v2350
      %v2415 = vsel %vm2287, %v1509, %v2351
      %v2416 = vsel %vm2288, %v1524, %v2352
      %v2417 = vsel %vm2289, %v1539, %v2353
      %v2418 = vsel %vm2290, %v1554, %v2354
      %v2419 = vsel %vm2291, %v1569, %v2355
      %v2420 = vsel %vm2292, %v1584, %v2356
      %v2421 = vsel %vm2293, %v1599, %v2357
      %v2422 = vsel %vm2294, %v1614, %v2358
      %v2423 = vsel %vm2295, %v1629, %v2359
      %v2424 = vsel %vm2296, %v1644, %v2360
      %v2425 = vsel %vm2297, %v1659, %v2361
      %v2426 = vsel %vm2298, %v1674, %v2362
      %v2427 = vsel %vm2299, %v1689, %v2363
      %v2428 = vsel %vm2300, %v1704, %v2364
      %v2429 = vsel %vm2301, %v1719, %v2365
      %v2430 = vsel %vm2302, %v1734, %v2366
      %v2431 = vsel %vm2303, %v1749, %v2367
      %v2432 = vsel %vm2304, %v1764, %v2368
      %v2433 = vsel %vm2305, %v1779, %v2369
      %v2434 = vsel %vm2306, %v1794, %v2370
      %v2435 = vsel %vm2307, %v1809, %v2371
      %v2436 = vsel %vm2308, %v1824, %v2372
      %v2437 = vsel %vm2309, %v1839, %v2373
      %v2438 = vsel %vm2310, %v1854, %v2374
      %v2439 = vsel %vm2311, %v1869, %v2375
      %v2440 = vsel %vm2312, %v1884, %v2376
      %v2441 = vsel %vm2313, %v1899, %v2377
      %v2442 = vsel %vm2314, %v1914, %v2378
      %v2443 = vsel %vm2315, %v1929, %v2379
      %v2444 = vsel %vm2316, %v1944, %v2380
      %v2445 = vsel %vm2317, %v1959, %v2381
      %v2446 = vsel %vm2318, %v1974, %v2382
      %v2447 = vsel %vm2319, %v1989, %v2383
      %v2448 = vsel %vm2320, %v2004, %v2384
      %v2449 = vsel %vm2321, %v2019, %v2385
      %v2450 = vsel %vm2322, %v2034, %v2386
      %v2451 = vsel %vm2323, %v2049, %v2387
      %v2452 = vsel %vm2324, %v2064, %v2388
      %v2453 = vsel %vm2325, %v2079, %v2389
      %v2454 = vsel %vm2326, %v2094, %v2390
      %v2455 = vsel %vm2327, %v2109, %v2391
      %v2456 = vsel %vm2328, %v2124, %v2392
      %v2457 = vsel %vm2329, %v2139, %v2393
      %v2458 = vsel %vm2330, %v2154, %v2394
      %v2459 = vsel %vm2331, %v2169, %v2395
      %v2460 = vsel %vm2332, %v2184, %v2396
      %v2461 = vsel %vm2333, %v2199, %v2397
      %v2462 = vsel %vm2334, %v2214, %v2398
      %v2463 = vsel %vm2335, %v2229, %v2399
      %v2464 = vsel %vm2336, %v2244, %v2400
      %v2465 = vsel %vm2337, %v2259, %v2401
      %v2466 = vsel %vm2338, %v2274, %v2402
      %v2467 = vsub.f32 1.0, %v2403
      %v2468 = vsub.f32 1.0, %v2404
      %v2469 = vsub.f32 1.0, %v2405
      %v2470 = vsub.f32 1.0, %v2406
      %v2471 = vsub.f32 1.0, %v2407
      %v2472 = vsub.f32 1.0, %v2408
      %v2473 = vsub.f32 1.0, %v2409
      %v2474 = vsub.f32 1.0, %v2410
      %v2475 = vsub.f32 1.0, %v2411
      %v2476 = vsub.f32 1.0, %v2412
      %v2477 = vsub.f32 1.0, %v2413
      %v2478 = vsub.f32 1.0, %v2414
      %v2479 = vsub.f32 1.0, %v2415
      %v2480 = vsub.f32 1.0, %v2416
      %v2481 = vsub.f32 1.0, %v2417
      %v2482 = vsub.f32 1.0, %v2418
      %v2483 = vsub.f32 1.0, %v2419
      %v2484 = vsub.f32 1.0, %v2420
      %v2485 = vsub.f32 1.0, %v2421
      %v2486 = vsub.f32 1.0, %v2422
      %v2487 = vsub.f32 1.0, %v2423
      %v2488 = vsub.f32 1.0, %v2424
      %v2489 = vsub.f32 1.0, %v2425
      %v2490 = vsub.f32 1.0, %v2426
      %v2491 = vsub.f32 1.0, %v2427
      %v2492 = vsub.f32 1.0, %v2428
      %v2493 = vsub.f32 1.0, %v2429
      %v2494 = vsub.f32 1.0, %v2430
      %v2495 = vsub.f32 1.0, %v2431
      %v2496 = vsub.f32 1.0, %v2432
      %v2497 = vsub.f32 1.0, %v2433
      %v2498 = vsub.f32 1.0, %v2434
      %v2499 = vsub.f32 1.0, %v2435
      %v2500 = vsub.f32 1.0, %v2436
      %v2501 = vsub.f32 1.0, %v2437
      %v2502 = vsub.f32 1.0, %v2438
      %v2503 = vsub.f32 1.0, %v2439
      %v2504 = vsub.f32 1.0, %v2440
      %v2505 = vsub.f32 1.0, %v2441
      %v2506 = vsub.f32 1.0, %v2442
      %v2507 = vsub.f32 1.0, %v2443
      %v2508 = vsub.f32 1.0, %v2444
      %v2509 = vsub.f32 1.0, %v2445
      %v2510 = vsub.f32 1.0, %v2446
      %v2511 = vsub.f32 1.0, %v2447
      %v2512 = vsub.f32 1.0, %v2448
      %v2513 = vsub.f32 1.0, %v2449
      %v2514 = vsub.f32 1.0, %v2450
      %v2515 = vsub.f32 1.0, %v2451
      %v2516 = vsub.f32 1.0, %v2452
      %v2517 = vsub.f32 1.0, %v2453
      %v2518 = vsub.f32 1.0, %v2454
      %v2519 = vsub.f32 1.0, %v2455
      %v2520 = vsub.f32 1.0, %v2456
      %v2521 = vsub.f32 1.0, %v2457
      %v2522 = vsub.f32 1.0, %v2458
      %v2523 = vsub.f32 1.0, %v2459
      %v2524 = vsub.f32 1.0, %v2460
      %v2525 = vsub.f32 1.0, %v2461
      %v2526 = vsub.f32 1.0, %v2462
      %v2527 = vsub.f32 1.0, %v2463
      %v2528 = vsub.f32 1.0, %v2464
      %v2529 = vsub.f32 1.0, %v2465
      %v2530 = vsub.f32 1.0, %v2466
      %vm2531 = vcmask 7168
      %2532 = vst.msk [vmem:[%s227] sm:$0xff] %vm2531, %v2403
      %2533 = vst.msk [vmem:[%s227 + $0x8] sm:$0xff] %vm2531, %v2404
      %2534 = vst.msk [vmem:[%s227 + $0x10] sm:$0xff] %vm2531, %v2405
      %2535 = vst.msk [vmem:[%s227 + $0x18] sm:$0xff] %vm2531, %v2406
      %2536 = vst.msk [vmem:[%s227 + $0x20] sm:$0xff] %vm2531, %v2407
      %2537 = vst.msk [vmem:[%s227 + $0x28] sm:$0xff] %vm2531, %v2408
      %2538 = vst.msk [vmem:[%s227 + $0x30] sm:$0xff] %vm2531, %v2409
      %2539 = vst.msk [vmem:[%s227 + $0x38] sm:$0xff] %vm2531, %v2410
      %2540 = vst.msk [vmem:[%s227 + $0x40] sm:$0xff] %vm2531, %v2411
      %2541 = vst.msk [vmem:[%s227 + $0x48] sm:$0xff] %vm2531, %v2412
      %2542 = vst.msk [vmem:[%s227 + $0x50] sm:$0xff] %vm2531, %v2413
      %2543 = vst.msk [vmem:[%s227 + $0x58] sm:$0xff] %vm2531, %v2414
      %2544 = vst.msk [vmem:[%s227 + $0x60] sm:$0xff] %vm2531, %v2415
      %2545 = vst.msk [vmem:[%s227 + $0x68] sm:$0xff] %vm2531, %v2416
      %2546 = vst.msk [vmem:[%s227 + $0x70] sm:$0xff] %vm2531, %v2417
      %2547 = vst.msk [vmem:[%s227 + $0x78] sm:$0xff] %vm2531, %v2418
      %2548 = vst.msk [vmem:[%s227 + $0x80] sm:$0xff] %vm2531, %v2419
      %2549 = vst.msk [vmem:[%s227 + $0x88] sm:$0xff] %vm2531, %v2420
      %2550 = vst.msk [vmem:[%s227 + $0x90] sm:$0xff] %vm2531, %v2421
      %2551 = vst.msk [vmem:[%s227 + $0x98] sm:$0xff] %vm2531, %v2422
      %2552 = vst.msk [vmem:[%s227 + $0xa0] sm:$0xff] %vm2531, %v2423
      %2553 = vst.msk [vmem:[%s227 + $0xa8] sm:$0xff] %vm2531, %v2424
      %2554 = vst.msk [vmem:[%s227 + $0xb0] sm:$0xff] %vm2531, %v2425
      %2555 = vst.msk [vmem:[%s227 + $0xb8] sm:$0xff] %vm2531, %v2426
      %2556 = vst.msk [vmem:[%s227 + $0xc0] sm:$0xff] %vm2531, %v2427
      %2557 = vst.msk [vmem:[%s227 + $0xc8] sm:$0xff] %vm2531, %v2428
      %2558 = vst.msk [vmem:[%s227 + $0xd0] sm:$0xff] %vm2531, %v2429
      %2559 = vst.msk [vmem:[%s227 + $0xd8] sm:$0xff] %vm2531, %v2430
      %2560 = vst.msk [vmem:[%s227 + $0xe0] sm:$0xff] %vm2531, %v2431
      %2561 = vst.msk [vmem:[%s227 + $0xe8] sm:$0xff] %vm2531, %v2432
      %2562 = vst.msk [vmem:[%s227 + $0xf0] sm:$0xff] %vm2531, %v2433
      %2563 = vst.msk [vmem:[%s227 + $0xf8] sm:$0xff] %vm2531, %v2434
      %2564 = vst.msk [vmem:[%s227 + $0x100] sm:$0xff] %vm2531, %v2435
      %2565 = vst.msk [vmem:[%s227 + $0x108] sm:$0xff] %vm2531, %v2436
      %2566 = vst.msk [vmem:[%s227 + $0x110] sm:$0xff] %vm2531, %v2437
      %2567 = vst.msk [vmem:[%s227 + $0x118] sm:$0xff] %vm2531, %v2438
      %2568 = vst.msk [vmem:[%s227 + $0x120] sm:$0xff] %vm2531, %v2439
      %2569 = vst.msk [vmem:[%s227 + $0x128] sm:$0xff] %vm2531, %v2440
      %2570 = vst.msk [vmem:[%s227 + $0x130] sm:$0xff] %vm2531, %v2441
      %2571 = vst.msk [vmem:[%s227 + $0x138] sm:$0xff] %vm2531, %v2442
      %2572 = vst.msk [vmem:[%s227 + $0x140] sm:$0xff] %vm2531, %v2443
      %2573 = vst.msk [vmem:[%s227 + $0x148] sm:$0xff] %vm2531, %v2444
      %2574 = vst.msk [vmem:[%s227 + $0x150] sm:$0xff] %vm2531, %v2445
      %2575 = vst.msk [vmem:[%s227 + $0x158] sm:$0xff] %vm2531, %v2446
      %2576 = vst.msk [vmem:[%s227 + $0x160] sm:$0xff] %vm2531, %v2447
      %2577 = vst.msk [vmem:[%s227 + $0x168] sm:$0xff] %vm2531, %v2448
      %2578 = vst.msk [vmem:[%s227 + $0x170] sm:$0xff] %vm2531, %v2449
      %2579 = vst.msk [vmem:[%s227 + $0x178] sm:$0xff] %vm2531, %v2450
      %2580 = vst.msk [vmem:[%s227 + $0x180] sm:$0xff] %vm2531, %v2451
      %2581 = vst.msk [vmem:[%s227 + $0x188] sm:$0xff] %vm2531, %v2452
      %2582 = vst.msk [vmem:[%s227 + $0x190] sm:$0xff] %vm2531, %v2453
      %2583 = vst.msk [vmem:[%s227 + $0x198] sm:$0xff] %vm2531, %v2454
      %2584 = vst.msk [vmem:[%s227 + $0x1a0] sm:$0xff] %vm2531, %v2455
      %2585 = vst.msk [vmem:[%s227 + $0x1a8] sm:$0xff] %vm2531, %v2456
      %2586 = vst.msk [vmem:[%s227 + $0x1b0] sm:$0xff] %vm2531, %v2457
      %2587 = vst.msk [vmem:[%s227 + $0x1b8] sm:$0xff] %vm2531, %v2458
      %2588 = vst.msk [vmem:[%s227 + $0x1c0] sm:$0xff] %vm2531, %v2459
      %2589 = vst.msk [vmem:[%s227 + $0x1c8] sm:$0xff] %vm2531, %v2460
      %2590 = vst.msk [vmem:[%s227 + $0x1d0] sm:$0xff] %vm2531, %v2461
      %2591 = vst.msk [vmem:[%s227 + $0x1d8] sm:$0xff] %vm2531, %v2462
      %2592 = vst.msk [vmem:[%s227 + $0x1e0] sm:$0xff] %vm2531, %v2463
      %2593 = vst.msk [vmem:[%s227 + $0x1e8] sm:$0xff] %vm2531, %v2464
      %2594 = vst.msk [vmem:[%s227 + $0x1f0] sm:$0xff] %vm2531, %v2465
      %2595 = vst.msk [vmem:[%s227 + $0x1f8] sm:$0xff] %vm2531, %v2466
      %2660 = vrot.lane.b32.xlu0 %v2467, 1
      %v2661 = vpop.permute.xlu0 %2660
      %2662 = vrot.lane.b32.xlu0 %v2468, 1
      %v2663 = vpop.permute.xlu0 %2662
      %2664 = vrot.lane.b32.xlu0 %v2469, 1
      %v2665 = vpop.permute.xlu0 %2664
      %2666 = vrot.lane.b32.xlu0 %v2470, 1
      %v2667 = vpop.permute.xlu0 %2666
      %2668 = vrot.lane.b32.xlu0 %v2471, 1
      %v2669 = vpop.permute.xlu0 %2668
      %2670 = vrot.lane.b32.xlu0 %v2472, 1
      %v2671 = vpop.permute.xlu0 %2670
      %2672 = vrot.lane.b32.xlu0 %v2473, 1
      %v2673 = vpop.permute.xlu0 %2672
      %2674 = vrot.lane.b32.xlu0 %v2474, 1
      %v2675 = vpop.permute.xlu0 %2674
      %2676 = vrot.lane.b32.xlu0 %v2475, 1
      %v2677 = vpop.permute.xlu0 %2676
      %2678 = vrot.lane.b32.xlu0 %v2476, 1
      %v2679 = vpop.permute.xlu0 %2678
      %2680 = vrot.lane.b32.xlu0 %v2477, 1
      %v2681 = vpop.permute.xlu0 %2680
      %2682 = vrot.lane.b32.xlu0 %v2478, 1
      %v2683 = vpop.permute.xlu0 %2682
      %2684 = vrot.lane.b32.xlu0 %v2479, 1
      %v2685 = vpop.permute.xlu0 %2684
      %2686 = vrot.lane.b32.xlu0 %v2480, 1
      %v2687 = vpop.permute.xlu0 %2686
      %2688 = vrot.lane.b32.xlu0 %v2481, 1
      %v2689 = vpop.permute.xlu0 %2688
      %2690 = vrot.lane.b32.xlu0 %v2482, 1
      %v2691 = vpop.permute.xlu0 %2690
      %2692 = vrot.lane.b32.xlu0 %v2483, 1
      %v2693 = vpop.permute.xlu0 %2692
      %2694 = vrot.lane.b32.xlu0 %v2484, 1
      %v2695 = vpop.permute.xlu0 %2694
      %2696 = vrot.lane.b32.xlu0 %v2485, 1
      %v2697 = vpop.permute.xlu0 %2696
      %2698 = vrot.lane.b32.xlu0 %v2486, 1
      %v2699 = vpop.permute.xlu0 %2698
      %2700 = vrot.lane.b32.xlu0 %v2487, 1
      %v2701 = vpop.permute.xlu0 %2700
      %2702 = vrot.lane.b32.xlu0 %v2488, 1
      %v2703 = vpop.permute.xlu0 %2702
      %2704 = vrot.lane.b32.xlu0 %v2489, 1
      %v2705 = vpop.permute.xlu0 %2704
      %2706 = vrot.lane.b32.xlu0 %v2490, 1
      %v2707 = vpop.permute.xlu0 %2706
      %2708 = vrot.lane.b32.xlu0 %v2491, 1
      %v2709 = vpop.permute.xlu0 %2708
      %2710 = vrot.lane.b32.xlu0 %v2492, 1
      %v2711 = vpop.permute.xlu0 %2710
      %2712 = vrot.lane.b32.xlu0 %v2493, 1
      %v2713 = vpop.permute.xlu0 %2712
      %2714 = vrot.lane.b32.xlu0 %v2494, 1
      %v2715 = vpop.permute.xlu0 %2714
      %2716 = vrot.lane.b32.xlu0 %v2495, 1
      %v2717 = vpop.permute.xlu0 %2716
      %2718 = vrot.lane.b32.xlu0 %v2496, 1
      %v2719 = vpop.permute.xlu0 %2718
      %2720 = vrot.lane.b32.xlu0 %v2497, 1
      %v2721 = vpop.permute.xlu0 %2720
      %2722 = vrot.lane.b32.xlu0 %v2498, 1
      %v2723 = vpop.permute.xlu0 %2722
      %2724 = vrot.lane.b32.xlu0 %v2499, 1
      %v2725 = vpop.permute.xlu0 %2724
      %2726 = vrot.lane.b32.xlu0 %v2500, 1
      %v2727 = vpop.permute.xlu0 %2726
      %2728 = vrot.lane.b32.xlu0 %v2501, 1
      %v2729 = vpop.permute.xlu0 %2728
      %2730 = vrot.lane.b32.xlu0 %v2502, 1
      %v2731 = vpop.permute.xlu0 %2730
      %2732 = vrot.lane.b32.xlu0 %v2503, 1
      %v2733 = vpop.permute.xlu0 %2732
      %2734 = vrot.lane.b32.xlu0 %v2504, 1
      %v2735 = vpop.permute.xlu0 %2734
      %2736 = vrot.lane.b32.xlu0 %v2505, 1
      %v2737 = vpop.permute.xlu0 %2736
      %2738 = vrot.lane.b32.xlu0 %v2506, 1
      %v2739 = vpop.permute.xlu0 %2738
      %2740 = vrot.lane.b32.xlu0 %v2507, 1
      %v2741 = vpop.permute.xlu0 %2740
      %2742 = vrot.lane.b32.xlu0 %v2508, 1
      %v2743 = vpop.permute.xlu0 %2742
      %2744 = vrot.lane.b32.xlu0 %v2509, 1
      %v2745 = vpop.permute.xlu0 %2744
      %2746 = vrot.lane.b32.xlu0 %v2510, 1
      %v2747 = vpop.permute.xlu0 %2746
      %2748 = vrot.lane.b32.xlu0 %v2511, 1
      %v2749 = vpop.permute.xlu0 %2748
      %2750 = vrot.lane.b32.xlu0 %v2512, 1
      %v2751 = vpop.permute.xlu0 %2750
      %2752 = vrot.lane.b32.xlu0 %v2513, 1
      %v2753 = vpop.permute.xlu0 %2752
      %2754 = vrot.lane.b32.xlu0 %v2514, 1
      %v2755 = vpop.permute.xlu0 %2754
      %2756 = vrot.lane.b32.xlu0 %v2515, 1
      %v2757 = vpop.permute.xlu0 %2756
      %2758 = vrot.lane.b32.xlu0 %v2516, 1
      %v2759 = vpop.permute.xlu0 %2758
      %2760 = vrot.lane.b32.xlu0 %v2517, 1
      %v2761 = vpop.permute.xlu0 %2760
      %2762 = vrot.lane.b32.xlu0 %v2518, 1
      %v2763 = vpop.permute.xlu0 %2762
      %2764 = vrot.lane.b32.xlu0 %v2519, 1
      %v2765 = vpop.permute.xlu0 %2764
      %2766 = vrot.lane.b32.xlu0 %v2520, 1
      %v2767 = vpop.permute.xlu0 %2766
      %2768 = vrot.lane.b32.xlu0 %v2521, 1
      %v2769 = vpop.permute.xlu0 %2768
      %2770 = vrot.lane.b32.xlu0 %v2522, 1
      %v2771 = vpop.permute.xlu0 %2770
      %2772 = vrot.lane.b32.xlu0 %v2523, 1
      %v2773 = vpop.permute.xlu0 %2772
      %2774 = vrot.lane.b32.xlu0 %v2524, 1
      %v2775 = vpop.permute.xlu0 %2774
      %2776 = vrot.lane.b32.xlu0 %v2525, 1
      %v2777 = vpop.permute.xlu0 %2776
      %2778 = vrot.lane.b32.xlu0 %v2526, 1
      %v2779 = vpop.permute.xlu0 %2778
      %2780 = vrot.lane.b32.xlu0 %v2527, 1
      %v2781 = vpop.permute.xlu0 %2780
      %2782 = vrot.lane.b32.xlu0 %v2528, 1
      %v2783 = vpop.permute.xlu0 %2782
      %2784 = vrot.lane.b32.xlu0 %v2529, 1
      %v2785 = vpop.permute.xlu0 %2784
      %2786 = vrot.lane.b32.xlu0 %v2530, 1
      %v2787 = vpop.permute.xlu0 %2786
      %vm2852 = vcmask 15368
      %2853 = vst.msk [vmem:[%s227] sm:$0xff] %vm2852, %v2661
      %2854 = vst.msk [vmem:[%s227 + $0x8] sm:$0xff] %vm2852, %v2663
      %2855 = vst.msk [vmem:[%s227 + $0x10] sm:$0xff] %vm2852, %v2665
      %2856 = vst.msk [vmem:[%s227 + $0x18] sm:$0xff] %vm2852, %v2667
      %2857 = vst.msk [vmem:[%s227 + $0x20] sm:$0xff] %vm2852, %v2669
      %2858 = vst.msk [vmem:[%s227 + $0x28] sm:$0xff] %vm2852, %v2671
      %2859 = vst.msk [vmem:[%s227 + $0x30] sm:$0xff] %vm2852, %v2673
      %2860 = vst.msk [vmem:[%s227 + $0x38] sm:$0xff] %vm2852, %v2675
      %2861 = vst.msk [vmem:[%s227 + $0x40] sm:$0xff] %vm2852, %v2677
      %2862 = vst.msk [vmem:[%s227 + $0x48] sm:$0xff] %vm2852, %v2679
      %2863 = vst.msk [vmem:[%s227 + $0x50] sm:$0xff] %vm2852, %v2681
      %2864 = vst.msk [vmem:[%s227 + $0x58] sm:$0xff] %vm2852, %v2683
      %2865 = vst.msk [vmem:[%s227 + $0x60] sm:$0xff] %vm2852, %v2685
      %2866 = vst.msk [vmem:[%s227 + $0x68] sm:$0xff] %vm2852, %v2687
      %2867 = vst.msk [vmem:[%s227 + $0x70] sm:$0xff] %vm2852, %v2689
      %2868 = vst.msk [vmem:[%s227 + $0x78] sm:$0xff] %vm2852, %v2691
      %2869 = vst.msk [vmem:[%s227 + $0x80] sm:$0xff] %vm2852, %v2693
      %2870 = vst.msk [vmem:[%s227 + $0x88] sm:$0xff] %vm2852, %v2695
      %2871 = vst.msk [vmem:[%s227 + $0x90] sm:$0xff] %vm2852, %v2697
      %2872 = vst.msk [vmem:[%s227 + $0x98] sm:$0xff] %vm2852, %v2699
      %2873 = vst.msk [vmem:[%s227 + $0xa0] sm:$0xff] %vm2852, %v2701
      %2874 = vst.msk [vmem:[%s227 + $0xa8] sm:$0xff] %vm2852, %v2703
      %2875 = vst.msk [vmem:[%s227 + $0xb0] sm:$0xff] %vm2852, %v2705
      %2876 = vst.msk [vmem:[%s227 + $0xb8] sm:$0xff] %vm2852, %v2707
      %2877 = vst.msk [vmem:[%s227 + $0xc0] sm:$0xff] %vm2852, %v2709
      %2878 = vst.msk [vmem:[%s227 + $0xc8] sm:$0xff] %vm2852, %v2711
      %2879 = vst.msk [vmem:[%s227 + $0xd0] sm:$0xff] %vm2852, %v2713
      %2880 = vst.msk [vmem:[%s227 + $0xd8] sm:$0xff] %vm2852, %v2715
      %2881 = vst.msk [vmem:[%s227 + $0xe0] sm:$0xff] %vm2852, %v2717
      %2882 = vst.msk [vmem:[%s227 + $0xe8] sm:$0xff] %vm2852, %v2719
      %2883 = vst.msk [vmem:[%s227 + $0xf0] sm:$0xff] %vm2852, %v2721
      %2884 = vst.msk [vmem:[%s227 + $0xf8] sm:$0xff] %vm2852, %v2723
      %2885 = vst.msk [vmem:[%s227 + $0x100] sm:$0xff] %vm2852, %v2725
      %2886 = vst.msk [vmem:[%s227 + $0x108] sm:$0xff] %vm2852, %v2727
      %2887 = vst.msk [vmem:[%s227 + $0x110] sm:$0xff] %vm2852, %v2729
      %2888 = vst.msk [vmem:[%s227 + $0x118] sm:$0xff] %vm2852, %v2731
      %2889 = vst.msk [vmem:[%s227 + $0x120] sm:$0xff] %vm2852, %v2733
      %2890 = vst.msk [vmem:[%s227 + $0x128] sm:$0xff] %vm2852, %v2735
      %2891 = vst.msk [vmem:[%s227 + $0x130] sm:$0xff] %vm2852, %v2737
      %2892 = vst.msk [vmem:[%s227 + $0x138] sm:$0xff] %vm2852, %v2739
      %2893 = vst.msk [vmem:[%s227 + $0x140] sm:$0xff] %vm2852, %v2741
      %2894 = vst.msk [vmem:[%s227 + $0x148] sm:$0xff] %vm2852, %v2743
      %2895 = vst.msk [vmem:[%s227 + $0x150] sm:$0xff] %vm2852, %v2745
      %2896 = vst.msk [vmem:[%s227 + $0x158] sm:$0xff] %vm2852, %v2747
      %2897 = vst.msk [vmem:[%s227 + $0x160] sm:$0xff] %vm2852, %v2749
      %2898 = vst.msk [vmem:[%s227 + $0x168] sm:$0xff] %vm2852, %v2751
      %2899 = vst.msk [vmem:[%s227 + $0x170] sm:$0xff] %vm2852, %v2753
      %2900 = vst.msk [vmem:[%s227 + $0x178] sm:$0xff] %vm2852, %v2755
      %2901 = vst.msk [vmem:[%s227 + $0x180] sm:$0xff] %vm2852, %v2757
      %2902 = vst.msk [vmem:[%s227 + $0x188] sm:$0xff] %vm2852, %v2759
      %2903 = vst.msk [vmem:[%s227 + $0x190] sm:$0xff] %vm2852, %v2761
      %2904 = vst.msk [vmem:[%s227 + $0x198] sm:$0xff] %vm2852, %v2763
      %2905 = vst.msk [vmem:[%s227 + $0x1a0] sm:$0xff] %vm2852, %v2765
      %2906 = vst.msk [vmem:[%s227 + $0x1a8] sm:$0xff] %vm2852, %v2767
      %2907 = vst.msk [vmem:[%s227 + $0x1b0] sm:$0xff] %vm2852, %v2769
      %2908 = vst.msk [vmem:[%s227 + $0x1b8] sm:$0xff] %vm2852, %v2771
      %2909 = vst.msk [vmem:[%s227 + $0x1c0] sm:$0xff] %vm2852, %v2773
      %2910 = vst.msk [vmem:[%s227 + $0x1c8] sm:$0xff] %vm2852, %v2775
      %2911 = vst.msk [vmem:[%s227 + $0x1d0] sm:$0xff] %vm2852, %v2777
      %2912 = vst.msk [vmem:[%s227 + $0x1d8] sm:$0xff] %vm2852, %v2779
      %2913 = vst.msk [vmem:[%s227 + $0x1e0] sm:$0xff] %vm2852, %v2781
      %2914 = vst.msk [vmem:[%s227 + $0x1e8] sm:$0xff] %vm2852, %v2783
      %2915 = vst.msk [vmem:[%s227 + $0x1f0] sm:$0xff] %vm2852, %v2785
      %2916 = vst.msk [vmem:[%s227 + $0x1f8] sm:$0xff] %vm2852, %v2787
      %s2917 = smul.u32 64, %s17
      %p2918 = scmp.lt.s32.totalorder %s2917, 127
      %s2919 = scalar_select %p2918, %s2917, 127
      %s2920 = smul.addr %s2919, 8
      %s2921 = scalar_lea.vmem %s5, %s2920
      // Predicated region
      $region41: #{policy_forward.1} parent=39 // pred_check
        %p2922 = pneg %p145
      $region42: #{policy_forward.1} parent=39 // pred_check_branch
        %2924 = sbr.rel (%p2922) target = $region44
      $region43: #{policy_forward.1} parent=39 // pred_region
        %s2925 = smul.u32 64, %s17
      $region44: #{policy_forward.1} parent=39 // pred_fallthru
        _
    $region40: #{policy_forward.1} parent=5 // pred_fallthru
      _
    %p2926 = scmp.le.s32.totalorder 2, %s12
    // Predicated region
    $region45: #{policy_forward.1} parent=5 // pred_check
      %p2927 = pneg %p2926
    $region46: #{policy_forward.1} parent=5 // pred_check_branch
      %2929 = sbr.rel (%p2927) target = $region48
    $region47: #{policy_forward.1} parent=5 // pred_region
      %s2930 = ssub.s32 %s12, 2
      // Predicated region
      $region49: #{policy_forward.1} parent=47 // pred_check
        %p2931 = pneg %p151
      $region50: #{policy_forward.1} parent=47 // pred_check_branch
        %2933 = sbr.rel (%p2931) target = $region52
      $region51: #{policy_forward.1} parent=47 // pred_region
        %s2934 = smul.u32 64, %s18
        %p2935 = scmp.lt.s32.totalorder %s2934, 127
        %s2936 = scalar_select %p2935, %s2934, 127
        %s2937 = smul.addr %s2936, 8
        %s2938 = scalar_lea.vmem %s5, %s2937
      $region52: #{policy_forward.1} parent=47 // pred_fallthru
        _
    $region48: #{policy_forward.1} parent=5 // pred_fallthru
      _
  $region6: #{policy_forward.1} parent=0 // loop_footer
    %s16 = sadd.s32 1, %s12
  $region7: #{policy_forward.1} parent=0 // loop_footer_branch
    %11 = sbr.rel target = $region3
  $region8: #{policy_forward.1} parent=0 // loop_exit
    _

</llo_original>
